<compile_context>
chip_gen: v6e
topology: v6e:2x2x1
jax: 0.10.0
libtpu: 0.0.40
codegen_flags: <defaults>
</compile_context>

<pallas_src>
import jax
import jax.numpy as jnp
from jax.experimental import pallas as pl
from jax.experimental.pallas import tpu as pltpu


def _round_up(x, m):
    return ((x + m - 1) // m) * m


def _tpu_info():
    """(physical VMEM bytes, TensorCores per chip) with safe fallbacks."""
    vmem = 128 * 1024 * 1024
    try:
        vmem = int(pltpu.get_tpu_info().vmem_capacity_bytes)
    except Exception:
        pass
    # Heuristic: 64 MiB VMEM per TC => v7x-class chip with 2 TCs sharing a grid.
    num_tc = 2 if vmem <= 64 * 1024 * 1024 else 1
    return vmem, num_tc


# ----------------------------------------------------------------------------
# Kernel
# ----------------------------------------------------------------------------
def gru_cell_2d_kernel(x_ref, h1_ref, h2_ref, wx_ref, wh1_ref, wh2_ref,
                       ball_ref, bh1n_ref, out_ref):
    # x_ref   : (tm, In)              activations, native dtype
    # h1_ref  : (tm, H)               recurrent state, native (f32) dtype
    # h2_ref  : (tm, H)
    # wx_ref  : (In, 3*Hp)            Wx.T, gate-column padded, compute dtype
    # wh1_ref : (H,  3*Hp)            Wh1.T
    # wh2_ref : (H,  3*Hp)            Wh2.T
    # ball_ref: (1, 3*Hp)  f32        bx + bh2 (+ bh1 r/z thirds folded in)
    # bh1n_ref: (1, Hp)    f32        n-gate third of bh1 (scaled by r)
    # out_ref : (tm, H)
    Hp = bh1n_ref.shape[1]
    H = out_ref.shape[1]
    cdt = wx_ref.dtype

    # Input + hidden2 path: two MXU dots with f32 accumulation.
    g = jnp.dot(x_ref[...].astype(cdt), wx_ref[...],
                preferred_element_type=jnp.float32)
    g = g + jnp.dot(h2_ref[...].astype(cdt), wh2_ref[...],
                    preferred_element_type=jnp.float32)
    g = g + ball_ref[...]

    # Hidden1 path (bias for r/z already folded into ball; n third kept apart).
    gh1 = jnp.dot(h1_ref[...].astype(cdt), wh1_ref[...],
                  preferred_element_type=jnp.float32)

    # Gate chunks [r | z | n]; Hp is a multiple of 128 -> lane-aligned slices.
    r = jax.nn.sigmoid(gh1[:, 0:Hp] + g[:, 0:Hp])
    z = jax.nn.sigmoid(gh1[:, Hp:2 * Hp] + g[:, Hp:2 * Hp])
    n = jnp.tanh(g[:, 2 * Hp:3 * Hp] + r * (gh1[:, 2 * Hp:3 * Hp] + bh1n_ref[...]))

    if H != Hp:           # static branch; drop padded gate lanes
        n = n[:, :H]
        z = z[:, :H]

    # Combine in f32 with the full-precision state: (1-z)*n + z*h1.
    h1f = h1_ref[...].astype(jnp.float32)
    out_ref[...] = (n + z * (h1f - n)).astype(out_ref.dtype)


# ----------------------------------------------------------------------------
# Parameter preparation (done ONCE, outside the per-step call)
# ----------------------------------------------------------------------------
def prepare_params(params, input_dim, hidden_dim, *, lane=128,
                   compute_dtype=jnp.bfloat16):
    """Transpose, gate-column pad (H -> Hp multiple of 128) and fuse biases.

    compute_dtype applies to the weights fed to the MXU (default bf16);
    accumulation, gate math and the state carry stay in f32 in the kernel.
    """
    In, H = input_dim, hidden_dim
    Hp = _round_up(H, lane)
    dt = jnp.dtype(compute_dtype)

    def pad_gate_cols(w_t, k):
        # (k, 3H) -> (k, 3Hp), padding each gate block independently with 0.
        w3 = w_t.reshape(k, 3, H)
        w3 = jnp.pad(w3, ((0, 0), (0, 0), (0, Hp - H)))
        return w3.reshape(k, 3 * Hp)

    def pad3(b):
        return jnp.pad(b.reshape(3, H), ((0, 0), (0, Hp - H)))   # (3, Hp)

    b_all3 = pad3(params["bx"]) + pad3(params["bh2"])
    bh1_3 = pad3(params["bh1"])
    # Fold the r/z thirds of bh1 into the shared bias; the n third must stay
    # separate because it is scaled by r inside the kernel.
    b_all3 = b_all3.at[0:2].add(bh1_3[0:2])

    return {
        "wx": pad_gate_cols(params["wx"].T, In).astype(dt),      # (In, 3Hp)
        "wh1": pad_gate_cols(params["wh1"].T, H).astype(dt),     # (H, 3Hp)
        "wh2": pad_gate_cols(params["wh2"].T, H).astype(dt),     # (H, 3Hp)
        "b_all": b_all3.reshape(1, 3 * Hp).astype(jnp.float32),  # (1, 3Hp)
        "bh1_n": bh1_3[2:3].astype(jnp.float32),                 # (1, Hp)
        "input_dim": In,
        "hidden_dim": H,
        "hidden_pad": Hp,
        "compute_dtype": dt,
    }


# ----------------------------------------------------------------------------
# pallas_call builder
# ----------------------------------------------------------------------------
def _gru_forward(x, h1, h2, prep, batch_tile, vmem_cap, weight_buffers):
    B = x.shape[0]
    In = prep["input_dim"]
    H = prep["hidden_dim"]
    Hp = prep["hidden_pad"]
    out_dtype = h1.dtype
    grid = (pl.cdiv(B, batch_tile),)

    # VMEM budget: weights (weight_buffers x), double-buffered activation and
    # output tiles, f32 gate intermediates, plus slack; capped at ~80% of the
    # physical VMEM of the current generation.
    w_item = jnp.dtype(prep["compute_dtype"]).itemsize
    act_item = max(jnp.dtype(x.dtype).itemsize, jnp.dtype(h1.dtype).itemsize)
    weight_bytes = weight_buffers * ((In + 2 * H) * 3 * Hp * w_item
                                     + (3 * Hp + Hp) * 4)
    act_bytes = 2 * batch_tile * (In + 2 * H) * act_item
    out_bytes = 2 * batch_tile * H * jnp.dtype(out_dtype).itemsize
    inter_bytes = (2 * 3 * Hp + 8 * Hp) * batch_tile * 4
    cap = int(vmem_cap * 0.8)
    need = (weight_bytes + act_bytes + out_bytes + inter_bytes) * 3 // 2 + (4 << 20)
    vmem_limit = max(min(need, cap), min(32 << 20, cap))

    bmap = lambda i: (i, 0)      # batch-tiled operands
    rmap = lambda i: (0, 0)      # resident (constant-index) operands

    if weight_buffers == 1:
        # Fetched once across the grid; single-buffering halves their VMEM.
        const_kw = dict(pipeline_mode=pl.Buffered(1))
    else:
        const_kw = {}

    return pl.pallas_call(
        gru_cell_2d_kernel,
        out_shape=jax.ShapeDtypeStruct((B, H), out_dtype),
        grid_spec=pltpu.PrefetchScalarGridSpec(
            num_scalar_prefetch=0,
            grid=grid,
            in_specs=[
                pl.BlockSpec((batch_tile, In), bmap),              # x
                pl.BlockSpec((batch_tile, H), bmap),               # h1
                pl.BlockSpec((batch_tile, H), bmap),               # h2
                pl.BlockSpec((In, 3 * Hp), rmap, **const_kw),      # Wx.T
                pl.BlockSpec((H, 3 * Hp), rmap, **const_kw),       # Wh1.T
                pl.BlockSpec((H, 3 * Hp), rmap, **const_kw),       # Wh2.T
                pl.BlockSpec((1, 3 * Hp), rmap, **const_kw),       # fused bias
                pl.BlockSpec((1, Hp), rmap, **const_kw),           # bh1 n-third
            ],
            out_specs=pl.BlockSpec((batch_tile, H), bmap),
        ),
        compiler_params=pltpu.CompilerParams(
            dimension_semantics=("parallel",),
            vmem_limit_bytes=int(vmem_limit)),
    )(x, h1, h2, prep["wx"], prep["wh1"], prep["wh2"],
      prep["b_all"], prep["bh1_n"])


# ----------------------------------------------------------------------------
# Wrapper
# ----------------------------------------------------------------------------
def gru_cell_2d(x, h1, h2, prep, *, batch_tile=None, max_batch_tile=256):
    """x: (B, In), h1/h2: (B, H). Returns new hidden state (B, H)."""
    B = x.shape[0]
    vmem_cap, num_tc = _tpu_info()

    # Sublane alignment of the activation tiles (8 for f32 inputs, 16 if all
    # activations are 16-bit).
    sub = 16 if all(jnp.dtype(a.dtype).itemsize == 2 for a in (x, h1, h2)) else 8

    if batch_tile is None:
        n_tiles = pl.cdiv(B, max_batch_tile)
        # On 2-TensorCore parts (v7x) a single-tile grid leaves one core idle:
        # split into >=2 batch tiles when the batch allows it.
        if n_tiles == 1 and num_tc > 1 and B >= num_tc * sub:
            n_tiles = num_tc
        # Balanced tiles (avoids a nearly-empty trailing tile).
        batch_tile = _round_up(pl.cdiv(B, n_tiles), sub)
    batch_tile = _round_up(int(batch_tile), sub)

    try:
        return _gru_forward(x, h1, h2, prep, batch_tile, vmem_cap,
                            weight_buffers=1)
    except Exception:
        # Fallback for jax versions that reject pl.Buffered(1) on
        # constant-index operands: default (double) buffering.
        return _gru_forward(x, h1, h2, prep, batch_tile, vmem_cap,
                            weight_buffers=2)


# ----------------------------------------------------------------------------
# Pure-JAX reference (mirrors the PyTorch forward)
# ----------------------------------------------------------------------------
def gru_cell_2d_ref(x, h1, h2, params):
    gx = x @ params["wx"].T + params["bx"]
    gh1 = h1 @ params["wh1"].T + params["bh1"]
    gh2 = h2 @ params["wh2"].T + params["bh2"]
    H = h1.shape[1]
    r = jax.nn.sigmoid(gh1[:, :H] + gh2[:, :H] + gx[:, :H])
    z = jax.nn.sigmoid(gh1[:, H:2 * H] + gh2[:, H:2 * H] + gx[:, H:2 * H])
    n = jnp.tanh(gx[:, 2 * H:] + gh2[:, 2 * H:] + r * gh1[:, 2 * H:])
    return (1.0 - z) * n + z * h1


def init_params(key, input_dim, hidden_dim, dtype=jnp.float32):
    ks = jax.random.split(key, 6)
    s = 0.1
    return {
        "wx": (jax.random.normal(ks[0], (3 * hidden_dim, input_dim)) * s).astype(dtype),
        "bx": (jax.random.normal(ks[1], (3 * hidden_dim,)) * s).astype(dtype),
        "wh1": (jax.random.normal(ks[2], (3 * hidden_dim, hidden_dim)) * s).astype(dtype),
        "bh1": (jax.random.normal(ks[3], (3 * hidden_dim,)) * s).astype(dtype),
        "wh2": (jax.random.normal(ks[4], (3 * hidden_dim, hidden_dim)) * s).astype(dtype),
        "bh2": (jax.random.normal(ks[5], (3 * hidden_dim,)) * s).astype(dtype),
    }


if __name__ == "__main__":
    key = jax.random.PRNGKey(0)
    k_x, k_h1, k_h2, k_p = jax.random.split(key, 4)

    batch, input_dim, hidden_dim = 8, 16, 32

    x = jax.random.normal(k_x, (batch, input_dim), dtype=jnp.float32)
    h1 = jax.random.normal(k_h1, (batch, hidden_dim), dtype=jnp.float32)
    h2 = jax.random.normal(k_h2, (batch, hidden_dim), dtype=jnp.float32)
    params = init_params(k_p, input_dim, hidden_dim)
    ref = gru_cell_2d_ref(x, h1, h2, params)

    # Default path: bf16 MXU weights, f32 accumulation / gate math / state.
    prep_bf16 = prepare_params(params, input_dim, hidden_dim)
    out_bf = jax.block_until_ready(gru_cell_2d(x, h1, h2, prep_bf16))
    assert out_bf.shape == (batch, hidden_dim)
    assert jnp.allclose(out_bf, ref, atol=5e-2, rtol=5e-2), "bf16 mismatch vs reference"

    # Full-precision weight path.
    prep_f32 = prepare_params(params, input_dim, hidden_dim,
                              compute_dtype=jnp.float32)
    out_f32 = jax.block_until_ready(gru_cell_2d(x, h1, h2, prep_f32))
    assert jnp.allclose(out_f32, ref, atol=1e-4, rtol=1e-4), "f32 mismatch vs reference"

    # Ragged batch (exercises the boundary-masked trailing batch tile).
    xr = jnp.concatenate([x, x[:2]], axis=0)
    h1r = jnp.concatenate([h1, h1[:2]], axis=0)
    h2r = jnp.concatenate([h2, h2[:2]], axis=0)
    out_r = jax.block_until_ready(gru_cell_2d(xr, h1r, h2r, prep_f32))
    refr = gru_cell_2d_ref(xr, h1r, h2r, params)
    assert out_r.shape == refr.shape
    assert jnp.allclose(out_r, refr, atol=1e-4, rtol=1e-4), "ragged-batch mismatch"

    print("KERNEL_OK")
</pallas_src>

<mosaic_0001>
module attributes {stable_mosaic.version = 11 : i64} {
  func.func @gru_cell_2d_kernel(%arg0: i32, %arg1: memref<8x16xf32, #tpu.memory_space<vmem>>, %arg2: memref<8x32xf32, #tpu.memory_space<vmem>>, %arg3: memref<8x32xf32, #tpu.memory_space<vmem>>, %arg4: memref<16x384xbf16, #tpu.memory_space<vmem>>, %arg5: memref<32x384xbf16, #tpu.memory_space<vmem>>, %arg6: memref<32x384xbf16, #tpu.memory_space<vmem>>, %arg7: memref<1x384xf32, #tpu.memory_space<vmem>>, %arg8: memref<1x128xf32, #tpu.memory_space<vmem>>, %arg9: memref<8x32xf32, #tpu.memory_space<vmem>>) attributes {dimension_semantics = [#tpu.dimension_semantics<parallel>], iteration_bounds = array<i64: 1>, scalar_prefetch = 0 : i64, scratch_operands = 0 : i64, tpu.core_type = #tpu.core_type<tc>, window_params = [{transform_indices = @transform_0, window_bounds = array<i64: 8, 16>}, {transform_indices = @transform_1, window_bounds = array<i64: 8, 32>}, {transform_indices = @transform_2, window_bounds = array<i64: 8, 32>}, {pipeline_mode = #tpu.pipeline_mode<synchronous>, transform_indices = @transform_3, window_bounds = array<i64: 16, 384>}, {pipeline_mode = #tpu.pipeline_mode<synchronous>, transform_indices = @transform_4, window_bounds = array<i64: 32, 384>}, {pipeline_mode = #tpu.pipeline_mode<synchronous>, transform_indices = @transform_5, window_bounds = array<i64: 32, 384>}, {pipeline_mode = #tpu.pipeline_mode<synchronous>, transform_indices = @transform_6, window_bounds = array<i64: 1, 384>}, {pipeline_mode = #tpu.pipeline_mode<synchronous>, transform_indices = @transform_7, window_bounds = array<i64: 1, 128>}, {transform_indices = @transform_8, window_bounds = array<i64: 8, 32>}]} {
    %c0 = arith.constant 0 : index
    %c0_0 = arith.constant 0 : index
    %0 = vector.load %arg1[%c0, %c0_0] : memref<8x16xf32, #tpu.memory_space<vmem>>, vector<8x16xf32>
    %1 = arith.truncf %0 : vector<8x16xf32> to vector<8x16xbf16>
    %c0_1 = arith.constant 0 : index
    %c0_2 = arith.constant 0 : index
    %2 = vector.load %arg4[%c0_1, %c0_2] : memref<16x384xbf16, #tpu.memory_space<vmem>>, vector<16x384xbf16>
    %cst = arith.constant dense<0.000000e+00> : vector<8x384xf32>
    %3 = tpu.matmul %1, %2, %cst {dimension_numbers = #tpu.dot_dimension_numbers<[1], [0], [0], [1], [0, 0, 1, 1], [], []>} : vector<8x16xbf16>, vector<16x384xbf16>, vector<8x384xf32> -> vector<8x384xf32>
    %c0_3 = arith.constant 0 : index
    %c0_4 = arith.constant 0 : index
    %4 = vector.load %arg3[%c0_3, %c0_4] : memref<8x32xf32, #tpu.memory_space<vmem>>, vector<8x32xf32>
    %5 = arith.truncf %4 : vector<8x32xf32> to vector<8x32xbf16>
    %c0_5 = arith.constant 0 : index
    %c0_6 = arith.constant 0 : index
    %6 = vector.load %arg6[%c0_5, %c0_6] : memref<32x384xbf16, #tpu.memory_space<vmem>>, vector<32x384xbf16>
    %cst_7 = arith.constant dense<0.000000e+00> : vector<8x384xf32>
    %7 = tpu.matmul %5, %6, %cst_7 {dimension_numbers = #tpu.dot_dimension_numbers<[1], [0], [0], [1], [0, 0, 1, 1], [], []>} : vector<8x32xbf16>, vector<32x384xbf16>, vector<8x384xf32> -> vector<8x384xf32>
    %8 = arith.addf %3, %7 : vector<8x384xf32>
    %c0_8 = arith.constant 0 : index
    %c0_9 = arith.constant 0 : index
    %9 = vector.load %arg7[%c0_8, %c0_9] : memref<1x384xf32, #tpu.memory_space<vmem>>, vector<1x384xf32>
    %10 = vector.broadcast %9 : vector<1x384xf32> to vector<8x384xf32>
    %11 = arith.addf %8, %10 : vector<8x384xf32>
    %c0_10 = arith.constant 0 : index
    %c0_11 = arith.constant 0 : index
    %12 = vector.load %arg2[%c0_10, %c0_11] : memref<8x32xf32, #tpu.memory_space<vmem>>, vector<8x32xf32>
    %13 = arith.truncf %12 : vector<8x32xf32> to vector<8x32xbf16>
    %c0_12 = arith.constant 0 : index
    %c0_13 = arith.constant 0 : index
    %14 = vector.load %arg5[%c0_12, %c0_13] : memref<32x384xbf16, #tpu.memory_space<vmem>>, vector<32x384xbf16>
    %cst_14 = arith.constant dense<0.000000e+00> : vector<8x384xf32>
    %15 = tpu.matmul %13, %14, %cst_14 {dimension_numbers = #tpu.dot_dimension_numbers<[1], [0], [0], [1], [0, 0, 1, 1], [], []>} : vector<8x32xbf16>, vector<32x384xbf16>, vector<8x384xf32> -> vector<8x384xf32>
    %16 = vector.extract_strided_slice %15 {offsets = [0, 0], sizes = [8, 128], strides = [1, 1]} : vector<8x384xf32> to vector<8x128xf32>
    %17 = vector.extract_strided_slice %11 {offsets = [0, 0], sizes = [8, 128], strides = [1, 1]} : vector<8x384xf32> to vector<8x128xf32>
    %18 = arith.addf %16, %17 : vector<8x128xf32>
    %19 = arith.negf %18 : vector<8x128xf32>
    %20 = math.exp %19 : vector<8x128xf32>
    %cst_15 = arith.constant 1.000000e+00 : f32
    %21 = vector.broadcast %cst_15 : f32 to vector<8x128xf32>
    %22 = arith.addf %21, %20 : vector<8x128xf32>
    %23 = arith.divf %21, %22 : vector<8x128xf32>
    %24 = vector.extract_strided_slice %15 {offsets = [0, 128], sizes = [8, 128], strides = [1, 1]} : vector<8x384xf32> to vector<8x128xf32>
    %25 = vector.extract_strided_slice %11 {offsets = [0, 128], sizes = [8, 128], strides = [1, 1]} : vector<8x384xf32> to vector<8x128xf32>
    %26 = arith.addf %24, %25 : vector<8x128xf32>
    %27 = arith.negf %26 : vector<8x128xf32>
    %28 = math.exp %27 : vector<8x128xf32>
    %cst_16 = arith.constant 1.000000e+00 : f32
    %29 = vector.broadcast %cst_16 : f32 to vector<8x128xf32>
    %30 = arith.addf %29, %28 : vector<8x128xf32>
    %31 = arith.divf %29, %30 : vector<8x128xf32>
    %32 = vector.extract_strided_slice %11 {offsets = [0, 256], sizes = [8, 128], strides = [1, 1]} : vector<8x384xf32> to vector<8x128xf32>
    %33 = vector.extract_strided_slice %15 {offsets = [0, 256], sizes = [8, 128], strides = [1, 1]} : vector<8x384xf32> to vector<8x128xf32>
    %c0_17 = arith.constant 0 : index
    %c0_18 = arith.constant 0 : index
    %34 = vector.load %arg8[%c0_17, %c0_18] : memref<1x128xf32, #tpu.memory_space<vmem>>, vector<1x128xf32>
    %35 = vector.broadcast %34 : vector<1x128xf32> to vector<8x128xf32>
    %36 = arith.addf %33, %35 : vector<8x128xf32>
    %37 = arith.mulf %23, %36 : vector<8x128xf32>
    %38 = arith.addf %32, %37 : vector<8x128xf32>
    %39 = math.tanh %38 : vector<8x128xf32>
    %40 = vector.extract_strided_slice %39 {offsets = [0, 0], sizes = [8, 32], strides = [1, 1]} : vector<8x128xf32> to vector<8x32xf32>
    %41 = vector.extract_strided_slice %31 {offsets = [0, 0], sizes = [8, 32], strides = [1, 1]} : vector<8x128xf32> to vector<8x32xf32>
    %c0_19 = arith.constant 0 : index
    %c0_20 = arith.constant 0 : index
    %42 = vector.load %arg2[%c0_19, %c0_20] : memref<8x32xf32, #tpu.memory_space<vmem>>, vector<8x32xf32>
    %43 = arith.subf %42, %40 : vector<8x32xf32>
    %44 = arith.mulf %41, %43 : vector<8x32xf32>
    %45 = arith.addf %40, %44 : vector<8x32xf32>
    %c0_21 = arith.constant 0 : index
    %c0_22 = arith.constant 0 : index
    %46 = vector.load %arg9[%c0_21, %c0_22] : memref<8x32xf32, #tpu.memory_space<vmem>>, vector<8x32xf32>
    tpu.vector_store %arg9[%c0_21, %c0_22], %45 {strides = array<i32>} : memref<8x32xf32, #tpu.memory_space<vmem>>, vector<8x32xf32>,
    return
  }
  func.func @transform_0(%arg0: i32) -> (i32, i32) {
    %c0_i32 = arith.constant 0 : i32
    %c0_i32_0 = arith.constant 0 : i32
    return %arg0, %c0_i32 : i32, i32
  }
  func.func @transform_1(%arg0: i32) -> (i32, i32) {
    %c0_i32 = arith.constant 0 : i32
    %c0_i32_0 = arith.constant 0 : i32
    return %arg0, %c0_i32 : i32, i32
  }
  func.func @transform_2(%arg0: i32) -> (i32, i32) {
    %c0_i32 = arith.constant 0 : i32
    %c0_i32_0 = arith.constant 0 : i32
    return %arg0, %c0_i32 : i32, i32
  }
  func.func @transform_3(%arg0: i32) -> (i32, i32) {
    %c0_i32 = arith.constant 0 : i32
    %c0_i32_0 = arith.constant 0 : i32
    %c0_i32_1 = arith.constant 0 : i32
    return %c0_i32, %c0_i32_0 : i32, i32
  }
  func.func @transform_4(%arg0: i32) -> (i32, i32) {
    %c0_i32 = arith.constant 0 : i32
    %c0_i32_0 = arith.constant 0 : i32
    %c0_i32_1 = arith.constant 0 : i32
    return %c0_i32, %c0_i32_0 : i32, i32
  }
  func.func @transform_5(%arg0: i32) -> (i32, i32) {
    %c0_i32 = arith.constant 0 : i32
    %c0_i32_0 = arith.constant 0 : i32
    %c0_i32_1 = arith.constant 0 : i32
    return %c0_i32, %c0_i32_0 : i32, i32
  }
  func.func @transform_6(%arg0: i32) -> (i32, i32) {
    %c0_i32 = arith.constant 0 : i32
    %c0_i32_0 = arith.constant 0 : i32
    %c0_i32_1 = arith.constant 0 : i32
    return %c0_i32, %c0_i32_0 : i32, i32
  }
  func.func @transform_7(%arg0: i32) -> (i32, i32) {
    %c0_i32 = arith.constant 0 : i32
    %c0_i32_0 = arith.constant 0 : i32
    %c0_i32_1 = arith.constant 0 : i32
    return %c0_i32, %c0_i32_0 : i32, i32
  }
  func.func @transform_8(%arg0: i32) -> (i32, i32) {
    %c0_i32 = arith.constant 0 : i32
    %c0_i32_0 = arith.constant 0 : i32
    return %arg0, %c0_i32 : i32, i32
  }
}

module attributes {stable_mosaic.version = 11 : i64} {
  func.func @gru_cell_2d_kernel(%arg0: i32, %arg1: memref<8x16xf32, #tpu.memory_space<vmem>>, %arg2: memref<8x32xf32, #tpu.memory_space<vmem>>, %arg3: memref<8x32xf32, #tpu.memory_space<vmem>>, %arg4: memref<16x384xbf16, #tpu.memory_space<vmem>>, %arg5: memref<32x384xbf16, #tpu.memory_space<vmem>>, %arg6: memref<32x384xbf16, #tpu.memory_space<vmem>>, %arg7: memref<1x384xf32, #tpu.memory_space<vmem>>, %arg8: memref<1x128xf32, #tpu.memory_space<vmem>>, %arg9: memref<8x32xf32, #tpu.memory_space<vmem>>) attributes {dimension_semantics = [#tpu.dimension_semantics<parallel>], iteration_bounds = array<i64: 1>, scalar_prefetch = 0 : i64, scratch_operands = 0 : i64, tpu.core_type = #tpu.core_type<tc>, window_params = [{transform_indices = @transform_0, window_bounds = array<i64: 8, 16>}, {transform_indices = @transform_1, window_bounds = array<i64: 8, 32>}, {transform_indices = @transform_2, window_bounds = array<i64: 8, 32>}, {pipeline_mode = #tpu.pipeline_mode<synchronous>, transform_indices = @transform_3, window_bounds = array<i64: 16, 384>}, {pipeline_mode = #tpu.pipeline_mode<synchronous>, transform_indices = @transform_4, window_bounds = array<i64: 32, 384>}, {pipeline_mode = #tpu.pipeline_mode<synchronous>, transform_indices = @transform_5, window_bounds = array<i64: 32, 384>}, {pipeline_mode = #tpu.pipeline_mode<synchronous>, transform_indices = @transform_6, window_bounds = array<i64: 1, 384>}, {pipeline_mode = #tpu.pipeline_mode<synchronous>, transform_indices = @transform_7, window_bounds = array<i64: 1, 128>}, {transform_indices = @transform_8, window_bounds = array<i64: 8, 32>}]} {
    %c0 = arith.constant 0 : index
    %c0_0 = arith.constant 0 : index
    %0 = vector.load %arg1[%c0, %c0_0] : memref<8x16xf32, #tpu.memory_space<vmem>>, vector<8x16xf32>
    %1 = arith.truncf %0 : vector<8x16xf32> to vector<8x16xbf16>
    %c0_1 = arith.constant 0 : index
    %c0_2 = arith.constant 0 : index
    %2 = vector.load %arg4[%c0_1, %c0_2] : memref<16x384xbf16, #tpu.memory_space<vmem>>, vector<16x384xbf16>
    %cst = arith.constant dense<0.000000e+00> : vector<8x384xf32>
    %3 = tpu.matmul %1, %2, %cst {dimension_numbers = #tpu.dot_dimension_numbers<[1], [0], [0], [1], [0, 0, 1, 1], [], []>} : vector<8x16xbf16>, vector<16x384xbf16>, vector<8x384xf32> -> vector<8x384xf32>
    %c0_3 = arith.constant 0 : index
    %c0_4 = arith.constant 0 : index
    %4 = vector.load %arg3[%c0_3, %c0_4] : memref<8x32xf32, #tpu.memory_space<vmem>>, vector<8x32xf32>
    %5 = arith.truncf %4 : vector<8x32xf32> to vector<8x32xbf16>
    %c0_5 = arith.constant 0 : index
    %c0_6 = arith.constant 0 : index
    %6 = vector.load %arg6[%c0_5, %c0_6] : memref<32x384xbf16, #tpu.memory_space<vmem>>, vector<32x384xbf16>
    %cst_7 = arith.constant dense<0.000000e+00> : vector<8x384xf32>
    %7 = tpu.matmul %5, %6, %cst_7 {dimension_numbers = #tpu.dot_dimension_numbers<[1], [0], [0], [1], [0, 0, 1, 1], [], []>} : vector<8x32xbf16>, vector<32x384xbf16>, vector<8x384xf32> -> vector<8x384xf32>
    %8 = arith.addf %3, %7 : vector<8x384xf32>
    %c0_8 = arith.constant 0 : index
    %c0_9 = arith.constant 0 : index
    %9 = vector.load %arg7[%c0_8, %c0_9] : memref<1x384xf32, #tpu.memory_space<vmem>>, vector<1x384xf32>
    %10 = vector.broadcast %9 : vector<1x384xf32> to vector<8x384xf32>
    %11 = arith.addf %8, %10 : vector<8x384xf32>
    %c0_10 = arith.constant 0 : index
    %c0_11 = arith.constant 0 : index
    %12 = vector.load %arg2[%c0_10, %c0_11] : memref<8x32xf32, #tpu.memory_space<vmem>>, vector<8x32xf32>
    %13 = arith.truncf %12 : vector<8x32xf32> to vector<8x32xbf16>
    %c0_12 = arith.constant 0 : index
    %c0_13 = arith.constant 0 : index
    %14 = vector.load %arg5[%c0_12, %c0_13] : memref<32x384xbf16, #tpu.memory_space<vmem>>, vector<32x384xbf16>
    %cst_14 = arith.constant dense<0.000000e+00> : vector<8x384xf32>
    %15 = tpu.matmul %13, %14, %cst_14 {dimension_numbers = #tpu.dot_dimension_numbers<[1], [0], [0], [1], [0, 0, 1, 1], [], []>} : vector<8x32xbf16>, vector<32x384xbf16>, vector<8x384xf32> -> vector<8x384xf32>
    %16 = vector.extract_strided_slice %15 {offsets = [0, 0], sizes = [8, 128], strides = [1, 1]} : vector<8x384xf32> to vector<8x128xf32>
    %17 = vector.extract_strided_slice %11 {offsets = [0, 0], sizes = [8, 128], strides = [1, 1]} : vector<8x384xf32> to vector<8x128xf32>
    %18 = arith.addf %16, %17 : vector<8x128xf32>
    %19 = arith.negf %18 : vector<8x128xf32>
    %20 = math.exp %19 : vector<8x128xf32>
    %cst_15 = arith.constant 1.000000e+00 : f32
    %21 = vector.broadcast %cst_15 : f32 to vector<8x128xf32>
    %22 = arith.addf %21, %20 : vector<8x128xf32>
    %23 = arith.divf %21, %22 : vector<8x128xf32>
    %24 = vector.extract_strided_slice %15 {offsets = [0, 128], sizes = [8, 128], strides = [1, 1]} : vector<8x384xf32> to vector<8x128xf32>
    %25 = vector.extract_strided_slice %11 {offsets = [0, 128], sizes = [8, 128], strides = [1, 1]} : vector<8x384xf32> to vector<8x128xf32>
    %26 = arith.addf %24, %25 : vector<8x128xf32>
    %27 = arith.negf %26 : vector<8x128xf32>
    %28 = math.exp %27 : vector<8x128xf32>
    %cst_16 = arith.constant 1.000000e+00 : f32
    %29 = vector.broadcast %cst_16 : f32 to vector<8x128xf32>
    %30 = arith.addf %29, %28 : vector<8x128xf32>
    %31 = arith.divf %29, %30 : vector<8x128xf32>
    %32 = vector.extract_strided_slice %11 {offsets = [0, 256], sizes = [8, 128], strides = [1, 1]} : vector<8x384xf32> to vector<8x128xf32>
    %33 = vector.extract_strided_slice %15 {offsets = [0, 256], sizes = [8, 128], strides = [1, 1]} : vector<8x384xf32> to vector<8x128xf32>
    %c0_17 = arith.constant 0 : index
    %c0_18 = arith.constant 0 : index
    %34 = vector.load %arg8[%c0_17, %c0_18] : memref<1x128xf32, #tpu.memory_space<vmem>>, vector<1x128xf32>
    %35 = vector.broadcast %34 : vector<1x128xf32> to vector<8x128xf32>
    %36 = arith.addf %33, %35 : vector<8x128xf32>
    %37 = arith.mulf %23, %36 : vector<8x128xf32>
    %38 = arith.addf %32, %37 : vector<8x128xf32>
    %39 = math.tanh %38 : vector<8x128xf32>
    %40 = vector.extract_strided_slice %39 {offsets = [0, 0], sizes = [8, 32], strides = [1, 1]} : vector<8x128xf32> to vector<8x32xf32>
    %41 = vector.extract_strided_slice %31 {offsets = [0, 0], sizes = [8, 32], strides = [1, 1]} : vector<8x128xf32> to vector<8x32xf32>
    %c0_19 = arith.constant 0 : index
    %c0_20 = arith.constant 0 : index
    %42 = vector.load %arg2[%c0_19, %c0_20] : memref<8x32xf32, #tpu.memory_space<vmem>>, vector<8x32xf32>
    %43 = arith.subf %42, %40 : vector<8x32xf32>
    %44 = arith.mulf %41, %43 : vector<8x32xf32>
    %45 = arith.addf %40, %44 : vector<8x32xf32>
    %c0_21 = arith.constant 0 : index
    %c0_22 = arith.constant 0 : index
    %46 = vector.load %arg9[%c0_21, %c0_22] : memref<8x32xf32, #tpu.memory_space<vmem>>, vector<8x32xf32>
    tpu.vector_store %arg9[%c0_21, %c0_22], %45 {strides = array<i32>} : memref<8x32xf32, #tpu.memory_space<vmem>>, vector<8x32xf32>,
    return
  }
  func.func @transform_0(%arg0: i32) -> (i32, i32) {
    %c0_i32 = arith.constant 0 : i32
    %c0_i32_0 = arith.constant 0 : i32
    return %arg0, %c0_i32 : i32, i32
  }
  func.func @transform_1(%arg0: i32) -> (i32, i32) {
    %c0_i32 = arith.constant 0 : i32
    %c0_i32_0 = arith.constant 0 : i32
    return %arg0, %c0_i32 : i32, i32
  }
  func.func @transform_2(%arg0: i32) -> (i32, i32) {
    %c0_i32 = arith.constant 0 : i32
    %c0_i32_0 = arith.constant 0 : i32
    return %arg0, %c0_i32 : i32, i32
  }
  func.func @transform_3(%arg0: i32) -> (i32, i32) {
    %c0_i32 = arith.constant 0 : i32
    %c0_i32_0 = arith.constant 0 : i32
    %c0_i32_1 = arith.constant 0 : i32
    return %c0_i32, %c0_i32_0 : i32, i32
  }
  func.func @transform_4(%arg0: i32) -> (i32, i32) {
    %c0_i32 = arith.constant 0 : i32
    %c0_i32_0 = arith.constant 0 : i32
    %c0_i32_1 = arith.constant 0 : i32
    return %c0_i32, %c0_i32_0 : i32, i32
  }
  func.func @transform_5(%arg0: i32) -> (i32, i32) {
    %c0_i32 = arith.constant 0 : i32
    %c0_i32_0 = arith.constant 0 : i32
    %c0_i32_1 = arith.constant 0 : i32
    return %c0_i32, %c0_i32_0 : i32, i32
  }
  func.func @transform_6(%arg0: i32) -> (i32, i32) {
    %c0_i32 = arith.constant 0 : i32
    %c0_i32_0 = arith.constant 0 : i32
    %c0_i32_1 = arith.constant 0 : i32
    return %c0_i32, %c0_i32_0 : i32, i32
  }
  func.func @transform_7(%arg0: i32) -> (i32, i32) {
    %c0_i32 = arith.constant 0 : i32
    %c0_i32_0 = arith.constant 0 : i32
    %c0_i32_1 = arith.constant 0 : i32
    return %c0_i32, %c0_i32_0 : i32, i32
  }
  func.func @transform_8(%arg0: i32) -> (i32, i32) {
    %c0_i32 = arith.constant 0 : i32
    %c0_i32_0 = arith.constant 0 : i32
    return %arg0, %c0_i32 : i32, i32
  }
}

</mosaic_0001>

<llo_original>
// kernel: tpu_custom_call.1
$region0: #{tpu_custom_call.1}
  #allocation0 [shape = 'u32[]', space=smem, size = 0x4, offset = 0x4, fixed_abs, tag = 'smem constant byte address 0x4 - core index']
  #allocation1 [shape = 'u32[144,128]{1,0:T(1,128)}', space=vmem, size = 0x12000, scoped, tag = 'internal scratch']
  %s0 = inlined_call_operand.hbm [shape: f32[8,16], index: 0, kind: input, shape index: {}]
  %s1 = inlined_call_operand.hbm [shape: f32[8,32], index: 1, kind: input, shape index: {}]
  %s2 = inlined_call_operand.hbm [shape: f32[8,32], index: 2, kind: input, shape index: {}]
  %s3 = inlined_call_operand.hbm [shape: bf16[16,384], index: 3, kind: input, shape index: {}]
  %s4 = inlined_call_operand.hbm [shape: bf16[32,384], index: 4, kind: input, shape index: {}]
  %s5 = inlined_call_operand.hbm [shape: bf16[32,384], index: 5, kind: input, shape index: {}]
  %s6 = inlined_call_operand.vmem [shape: f32[1,384], index: 6, kind: input, shape index: {}]
  %s7 = inlined_call_operand.vmem [shape: f32[1,128], index: 7, kind: input, shape index: {}]
  %s8 = inlined_call_operand.hbm [shape: f32[8,32], index: 8, kind: output, shape index: {}]
  %s9 = sld [smem:[#allocation0]]
  $region66: #{tpu_custom_call.1} parent=0
    _
  %s11 = ssub.s32 1, %s9
  %s12 = scalar_select 0, %s11, %s9
  $region1: #{tpu_custom_call.1} parent=0
    #allocation2 [shape = 'u8[4096]{0}', space=vmem, size = 0x1000, scoped, tag = 'input window, operand 0, single buffered']
    #allocation3 [shape = 's32[1]{0}', space=sflag, size = 0x4, scoped, tag = 'scoped memory for tpu_custom_call.1']
    #allocation4 [shape = 's32[1]{0}', space=sflag, size = 0x4, scoped, tag = 'scoped memory for tpu_custom_call.1']
    #allocation5 [shape = 'u8[4096]{0}', space=vmem, size = 0x1000, scoped, tag = 'input window, operand 1, single buffered']
    #allocation6 [shape = 's32[1]{0}', space=sflag, size = 0x4, scoped, tag = 'scoped memory for tpu_custom_call.1']
    #allocation7 [shape = 'u8[4096]{0}', space=vmem, size = 0x1000, scoped, tag = 'input window, operand 2, single buffered']
    #allocation8 [shape = 'u8[12288]{0}', space=vmem, size = 0x3000, scoped, tag = 'input window, operand 3, single buffered']
    #allocation9 [shape = 's32[1]{0}', space=sflag, size = 0x4, scoped, tag = 'scoped memory for tpu_custom_call.1']
    #allocation10 [shape = 'u8[24576]{0}', space=vmem, size = 0x6000, scoped, tag = 'input window, operand 4, single buffered']
    #allocation11 [shape = 'u8[24576]{0}', space=vmem, size = 0x6000, scoped, tag = 'input window, operand 5, single buffered']
    #allocation12 [shape = 's32[1]{0}', space=sflag, size = 0x4, scoped, tag = 'scoped memory for tpu_custom_call.1']
    #allocation13 [shape = 'u8[4096]{0}', space=vmem, size = 0x1000, scoped, tag = 'output window, operand 0, single buffered']
    %13 = vsyncpa [#allocation3], 0
    %14 = vsyncpa [#allocation6], 0
    %15 = vsyncpa [#allocation9], 0
    %16 = vsyncpa [#allocation12], 0
    %17 = vsyncpa [#allocation4], 0
    // Predicated region
    $region2: #{tpu_custom_call.1} parent=1 // pred_check
      _
    $region3: #{tpu_custom_call.1} parent=1 // pred_check_branch
      %19 = sbr.rel (0) target = $region5
    $region4: #{tpu_custom_call.1} parent=1 // pred_region
      %s21 = ssub.s32 128, 128
      %22 = vsyncadd [#allocation3], %s21
      %s24 = sshll.u32 [#allocation2], 4
      %s25 = int_to_ptr.vmem [resolvable:$true] %s24
      %27 = dma.hbm_to_vmem [thread:$0]  %s0, 128, %s25, [#allocation3]
    $region5: #{tpu_custom_call.1} parent=1 // pred_fallthru
      _
    // Predicated region
    $region6: #{tpu_custom_call.1} parent=1 // pred_check
      _
    $region7: #{tpu_custom_call.1} parent=1 // pred_check_branch
      %29 = sbr.rel (0) target = $region9
    $region8: #{tpu_custom_call.1} parent=1 // pred_region
      %s31 = ssub.s32 128, 128
      %32 = vsyncadd [#allocation6], %s31
      %s34 = sshll.u32 [#allocation5], 4
      %s35 = int_to_ptr.vmem [resolvable:$true] %s34
      %37 = dma.hbm_to_vmem [thread:$0]  %s1, 128, %s35, [#allocation6]
    $region9: #{tpu_custom_call.1} parent=1 // pred_fallthru
      _
    // Predicated region
    $region10: #{tpu_custom_call.1} parent=1 // pred_check
      _
    $region11: #{tpu_custom_call.1} parent=1 // pred_check_branch
      %39 = sbr.rel (0) target = $region13
    $region12: #{tpu_custom_call.1} parent=1 // pred_region
      %s41 = ssub.s32 128, 128
      %42 = vsyncadd [#allocation6], %s41
      %s44 = sshll.u32 [#allocation7], 4
      %s45 = int_to_ptr.vmem [resolvable:$true] %s44
      %47 = dma.hbm_to_vmem [thread:$0]  %s2, 128, %s45, [#allocation6]
    $region13: #{tpu_custom_call.1} parent=1 // pred_fallthru
      _
    // Predicated region
    $region14: #{tpu_custom_call.1} parent=1 // pred_check
      _
    $region15: #{tpu_custom_call.1} parent=1 // pred_check_branch
      %49 = sbr.rel (0) target = $region17
    $region16: #{tpu_custom_call.1} parent=1 // pred_region
      %s51 = ssub.s32 384, 384
      %52 = vsyncadd [#allocation9], %s51
      %s53 = sshll.u32 [#allocation8], 4
      %s54 = int_to_ptr.vmem [resolvable:$true] %s53
      %59 = dma.hbm_to_vmem [thread:$0]  %s3, 384, %s54, [#allocation9], 192, 192, 12
    $region17: #{tpu_custom_call.1} parent=1 // pred_fallthru
      _
    // Predicated region
    $region18: #{tpu_custom_call.1} parent=1 // pred_check
      _
    $region19: #{tpu_custom_call.1} parent=1 // pred_check_branch
      %61 = sbr.rel (0) target = $region21
    $region20: #{tpu_custom_call.1} parent=1 // pred_region
      %s63 = ssub.s32 768, 768
      %64 = vsyncadd [#allocation9], %s63
      %s65 = sshll.u32 [#allocation10], 4
      %s66 = int_to_ptr.vmem [resolvable:$true] %s65
      %71 = dma.hbm_to_vmem [thread:$0]  %s4, 768, %s66, [#allocation9], 192, 192, 12
    $region21: #{tpu_custom_call.1} parent=1 // pred_fallthru
      _
    // Predicated region
    $region22: #{tpu_custom_call.1} parent=1 // pred_check
      _
    $region23: #{tpu_custom_call.1} parent=1 // pred_check_branch
      %73 = sbr.rel (0) target = $region25
    $region24: #{tpu_custom_call.1} parent=1 // pred_region
      %s75 = ssub.s32 768, 768
      %76 = vsyncadd [#allocation12], %s75
      %s77 = sshll.u32 [#allocation11], 4
      %s78 = int_to_ptr.vmem [resolvable:$true] %s77
      %83 = dma.hbm_to_vmem [thread:$0]  %s5, 768, %s78, [#allocation12], 192, 192, 12
    $region25: #{tpu_custom_call.1} parent=1 // pred_fallthru
      _
    // Predicated region
    $region26: #{tpu_custom_call.1} parent=1 // pred_check
      _
    $region27: #{tpu_custom_call.1} parent=1 // pred_check_branch
      %85 = sbr.rel (0) target = $region29
    $region28: #{tpu_custom_call.1} parent=1 // pred_region
      _
    $region29: #{tpu_custom_call.1} parent=1 // pred_fallthru
      _
    // Predicated region
    $region30: #{tpu_custom_call.1} parent=1 // pred_check
      _
    $region31: #{tpu_custom_call.1} parent=1 // pred_check_branch
      %87 = sbr.rel (0) target = $region33
    $region32: #{tpu_custom_call.1} parent=1 // pred_region
      _
    $region33: #{tpu_custom_call.1} parent=1 // pred_fallthru
      _
    // Predicated region
    $region34: #{tpu_custom_call.1} parent=1 // pred_check
      _
    $region35: #{tpu_custom_call.1} parent=1 // pred_check_branch
      %89 = sbr.rel (0) target = $region37
    $region36: #{tpu_custom_call.1} parent=1 // pred_region
      %90 = dma.done [#allocation3], 128
    $region37: #{tpu_custom_call.1} parent=1 // pred_fallthru
      _
    // Predicated region
    $region38: #{tpu_custom_call.1} parent=1 // pred_check
      _
    $region39: #{tpu_custom_call.1} parent=1 // pred_check_branch
      %92 = sbr.rel (0) target = $region41
    $region40: #{tpu_custom_call.1} parent=1 // pred_region
      %93 = dma.done [#allocation6], 128
    $region41: #{tpu_custom_call.1} parent=1 // pred_fallthru
      _
    // Predicated region
    $region42: #{tpu_custom_call.1} parent=1 // pred_check
      _
    $region43: #{tpu_custom_call.1} parent=1 // pred_check_branch
      %95 = sbr.rel (0) target = $region45
    $region44: #{tpu_custom_call.1} parent=1 // pred_region
      %96 = dma.done [#allocation6], 128
    $region45: #{tpu_custom_call.1} parent=1 // pred_fallthru
      _
    // Predicated region
    $region46: #{tpu_custom_call.1} parent=1 // pred_check
      _
    $region47: #{tpu_custom_call.1} parent=1 // pred_check_branch
      %98 = sbr.rel (0) target = $region49
    $region48: #{tpu_custom_call.1} parent=1 // pred_region
      %99 = dma.done [#allocation9], 384
    $region49: #{tpu_custom_call.1} parent=1 // pred_fallthru
      _
    // Predicated region
    $region50: #{tpu_custom_call.1} parent=1 // pred_check
      _
    $region51: #{tpu_custom_call.1} parent=1 // pred_check_branch
      %101 = sbr.rel (0) target = $region53
    $region52: #{tpu_custom_call.1} parent=1 // pred_region
      %102 = dma.done [#allocation9], 768
    $region53: #{tpu_custom_call.1} parent=1 // pred_fallthru
      _
    // Predicated region
    $region54: #{tpu_custom_call.1} parent=1 // pred_check
      _
    $region55: #{tpu_custom_call.1} parent=1 // pred_check_branch
      %104 = sbr.rel (0) target = $region57
    $region56: #{tpu_custom_call.1} parent=1 // pred_region
      %105 = dma.done [#allocation12], 768
    $region57: #{tpu_custom_call.1} parent=1 // pred_fallthru
      _
    %v107 = vld [vmem:[#allocation2] sm:$0xff]
    %v108 = vpack.c.bf16 %v107, %v107
    %v109 = vld [vmem:[#allocation8] sm:$0xff]
    %v110 = vld [vmem:[#allocation8 + $0x8] sm:$0xf]
    %v111 = vld [vmem:[#allocation8 + $0xc] sm:$0xff]
    %v112 = vld [vmem:[#allocation8 + $0x14] sm:$0xf]
    %v113 = vld [vmem:[#allocation7] sm:$0xff]
    %v114 = vpack.c.bf16 %v113, %v113
    %v115 = vld [vmem:[#allocation11] sm:$0xff]
    %v116 = vld [vmem:[#allocation11 + $0x8] sm:$0xf]
    %v117 = vld [vmem:[#allocation11 + $0xc] sm:$0xff]
    %v118 = vld [vmem:[#allocation11 + $0x14] sm:$0xf]
    %v119 = vld [vmem:[#allocation11 + $0x18] sm:$0xff]
    %v120 = vld [vmem:[#allocation11 + $0x20] sm:$0xf]
    %v121 = vld [vmem:[#allocation11 + $0x24] sm:$0xff]
    %v122 = vld [vmem:[#allocation11 + $0x2c] sm:$0xf]
    %v131 = vunpack.c.l.b16 %v115
    %v132 = vunpack.c.h.b16 %v115
    %v133 = vunpack.c.l.b16 %v116
    %v134 = vunpack.c.l.b16 %v117
    %v135 = vunpack.c.h.b16 %v117
    %v136 = vunpack.c.l.b16 %v118
    %v137 = vunpack.c.l.b16 %v119
    %v138 = vunpack.c.h.b16 %v119
    %v139 = vunpack.c.l.b16 %v120
    %v140 = vunpack.c.l.b16 %v121
    %v141 = vunpack.c.h.b16 %v121
    %v142 = vunpack.c.l.b16 %v122
    %v143 = vpack.c.b16 %v134, %v131
    %v144 = vpack.c.b16 %v135, %v132
    %v145 = vpack.c.b16 %v136, %v133
    %v146 = vpack.c.b16 %v140, %v137
    %v147 = vpack.c.b16 %v141, %v138
    %v148 = vpack.c.b16 %v142, %v139
    %vm155 = vcmask 261120
    %v157 = vsel %vm155, %v114, 0
    %159 = vmatprep.subr.bf16.mxu0 0
    %160 = vmatpush1.bf16.msra.mxu0 0
    %161 = vmatprep.subr.bf16.mxu0 0
    %162 = vmatpush1.bf16.msra.mxu0 0
    %163 = vmatprep.subr.bf16.mxu0 0
    %164 = vmatpush1.bf16.msra.mxu0 0
    %165 = vmatprep.subr.bf16.mxu0 0
    %166 = vmatpush1.bf16.msra.mxu0 0
    %167 = vmatprep.subr.bf16.mxu0 0
    %168 = vmatpush1.bf16.msra.mxu0 0
    %169 = vmatprep.subr.bf16.mxu0 0
    %170 = vmatpush1.bf16.msra.mxu0 0
    %171 = vmatprep.subr.bf16.mxu0 %v147
    %172 = vmatpush1.bf16.msra.mxu0 %v146
    %173 = vmatprep.subr.bf16.mxu0 %v144
    %174 = vmatpush1.bf16.msra.mxu0 %v143
    %175 = vmatprep.subr.bf16.mxu0 0
    %176 = vmatpush2.bf16.msra.mxu0 0
    %177 = vmatprep.subr.bf16.mxu0 0
    %178 = vmatpush2.bf16.msra.mxu0 0
    %179 = vmatprep.subr.bf16.mxu0 0
    %180 = vmatpush2.bf16.msra.mxu0 0
    %181 = vmatprep.subr.bf16.mxu0 0
    %182 = vmatpush2.bf16.msra.mxu0 0
    %183 = vmatprep.subr.bf16.mxu0 0
    %184 = vmatpush2.bf16.msra.mxu0 0
    %185 = vmatprep.subr.bf16.mxu0 0
    %186 = vmatpush2.bf16.msra.mxu0 0
    %187 = vmatprep.subr.bf16.mxu0 0
    %188 = vmatpush2.bf16.msra.mxu0 0
    %189 = vmatprep.subr.bf16.mxu0 0
    %190 = vmatpush2.bf16.msra.mxu0 0
    %191 = vmatprep.mubr.bf16.mxu0 0
    %192 = vmatmul.mubr.bf16.gmra.mxu0 %v157
    %v193 = vpop.f32.mrf.mxu0
    %v194 = vadd.f32 0.0, %v193
    %v195 = vpop.f32.mrf.mxu0
    %v196 = vadd.f32 0.0, %v195
    %v197 = vpop.f32.mrf.mxu0
    %v198 = vpop.f32.mrf.mxu0
    %199 = vdwg.mxu0
    %200 = vmatprep.subr.bf16.mxu0 0
    %201 = vmatpush1.bf16.msra.mxu0 0
    %202 = vmatprep.subr.bf16.mxu0 0
    %203 = vmatpush1.bf16.msra.mxu0 0
    %204 = vmatprep.subr.bf16.mxu0 0
    %205 = vmatpush1.bf16.msra.mxu0 0
    %206 = vmatprep.subr.bf16.mxu0 0
    %207 = vmatpush1.bf16.msra.mxu0 0
    %208 = vmatprep.subr.bf16.mxu0 0
    %209 = vmatpush1.bf16.msra.mxu0 0
    %210 = vmatprep.subr.bf16.mxu0 0
    %211 = vmatpush1.bf16.msra.mxu0 0
    %212 = vmatprep.subr.bf16.mxu0 0
    %213 = vmatpush1.bf16.msra.mxu0 %v148
    %214 = vmatprep.subr.bf16.mxu0 0
    %215 = vmatpush1.bf16.msra.mxu0 %v145
    %216 = vmatprep.subr.bf16.mxu0 0
    %217 = vmatpush2.bf16.msra.mxu0 0
    %218 = vmatprep.subr.bf16.mxu0 0
    %219 = vmatpush2.bf16.msra.mxu0 0
    %220 = vmatprep.subr.bf16.mxu0 0
    %221 = vmatpush2.bf16.msra.mxu0 0
    %222 = vmatprep.subr.bf16.mxu0 0
    %223 = vmatpush2.bf16.msra.mxu0 0
    %224 = vmatprep.subr.bf16.mxu0 0
    %225 = vmatpush2.bf16.msra.mxu0 0
    %226 = vmatprep.subr.bf16.mxu0 0
    %227 = vmatpush2.bf16.msra.mxu0 0
    %228 = vmatprep.subr.bf16.mxu0 0
    %229 = vmatpush2.bf16.msra.mxu0 0
    %230 = vmatprep.subr.bf16.mxu0 0
    %231 = vmatpush2.bf16.msra.mxu0 0
    %232 = vmatprep.mubr.bf16.mxu0 0
    %233 = vmatmul.mubr.bf16.gmra.mxu0 %v157
    %v234 = vpop.f32.mrf.mxu0
    %v235 = vadd.f32 0.0, %v234
    %v236 = vpop.f32.mrf.mxu0
    %v237 = vpop.f32.mrf.mxu0
    %v238 = vpop.f32.mrf.mxu0
    %239 = vdwg.mxu0
    %v244 = vunpack.c.l.b16 %v109
    %v245 = vunpack.c.h.b16 %v109
    %v246 = vunpack.c.l.b16 %v110
    %v247 = vunpack.c.l.b16 %v111
    %v248 = vunpack.c.h.b16 %v111
    %v249 = vunpack.c.l.b16 %v112
    %v250 = vpack.c.b16 %v247, %v244
    %v251 = vpack.c.b16 %v248, %v245
    %v252 = vpack.c.b16 %v249, %v246
    %vm256 = vcmask 130048
    %v258 = vsel %vm256, %v108, 0
    %260 = vmatprep.subr.bf16.mxu0 0
    %261 = vmatpush1.bf16.msra.mxu0 0
    %262 = vmatprep.subr.bf16.mxu0 0
    %263 = vmatpush1.bf16.msra.mxu0 0
    %264 = vmatprep.subr.bf16.mxu0 0
    %265 = vmatpush1.bf16.msra.mxu0 0
    %266 = vmatprep.subr.bf16.mxu0 0
    %267 = vmatpush1.bf16.msra.mxu0 0
    %268 = vmatprep.subr.bf16.mxu0 0
    %269 = vmatpush1.bf16.msra.mxu0 0
    %270 = vmatprep.subr.bf16.mxu0 0
    %271 = vmatpush1.bf16.msra.mxu0 0
    %272 = vmatprep.subr.bf16.mxu0 0
    %273 = vmatpush1.bf16.msra.mxu0 0
    %274 = vmatprep.subr.bf16.mxu0 %v251
    %275 = vmatpush1.bf16.msra.mxu0 %v250
    %276 = vmatprep.subr.bf16.mxu0 0
    %277 = vmatpush2.bf16.msra.mxu0 0
    %278 = vmatprep.subr.bf16.mxu0 0
    %279 = vmatpush2.bf16.msra.mxu0 0
    %280 = vmatprep.subr.bf16.mxu0 0
    %281 = vmatpush2.bf16.msra.mxu0 0
    %282 = vmatprep.subr.bf16.mxu0 0
    %283 = vmatpush2.bf16.msra.mxu0 0
    %284 = vmatprep.subr.bf16.mxu0 0
    %285 = vmatpush2.bf16.msra.mxu0 0
    %286 = vmatprep.subr.bf16.mxu0 0
    %287 = vmatpush2.bf16.msra.mxu0 0
    %288 = vmatprep.subr.bf16.mxu0 0
    %289 = vmatpush2.bf16.msra.mxu0 0
    %290 = vmatprep.subr.bf16.mxu0 0
    %291 = vmatpush2.bf16.msra.mxu0 0
    %292 = vmatprep.mubr.bf16.mxu0 0
    %293 = vmatmul.mubr.bf16.gmra.mxu0 %v258
    %v294 = vpop.f32.mrf.mxu0
    %v295 = vadd.f32 %v194, %v294
    %v296 = vpop.f32.mrf.mxu0
    %v297 = vadd.f32 %v196, %v296
    %v298 = vpop.f32.mrf.mxu0
    %v299 = vpop.f32.mrf.mxu0
    %300 = vdwg.mxu0
    %301 = vmatprep.subr.bf16.mxu0 0
    %302 = vmatpush1.bf16.msra.mxu0 0
    %303 = vmatprep.subr.bf16.mxu0 0
    %304 = vmatpush1.bf16.msra.mxu0 0
    %305 = vmatprep.subr.bf16.mxu0 0
    %306 = vmatpush1.bf16.msra.mxu0 0
    %307 = vmatprep.subr.bf16.mxu0 0
    %308 = vmatpush1.bf16.msra.mxu0 0
    %309 = vmatprep.subr.bf16.mxu0 0
    %310 = vmatpush1.bf16.msra.mxu0 0
    %311 = vmatprep.subr.bf16.mxu0 0
    %312 = vmatpush1.bf16.msra.mxu0 0
    %313 = vmatprep.subr.bf16.mxu0 0
    %314 = vmatpush1.bf16.msra.mxu0 0
    %315 = vmatprep.subr.bf16.mxu0 0
    %316 = vmatpush1.bf16.msra.mxu0 %v252
    %317 = vmatprep.subr.bf16.mxu0 0
    %318 = vmatpush2.bf16.msra.mxu0 0
    %319 = vmatprep.subr.bf16.mxu0 0
    %320 = vmatpush2.bf16.msra.mxu0 0
    %321 = vmatprep.subr.bf16.mxu0 0
    %322 = vmatpush2.bf16.msra.mxu0 0
    %323 = vmatprep.subr.bf16.mxu0 0
    %324 = vmatpush2.bf16.msra.mxu0 0
    %325 = vmatprep.subr.bf16.mxu0 0
    %326 = vmatpush2.bf16.msra.mxu0 0
    %327 = vmatprep.subr.bf16.mxu0 0
    %328 = vmatpush2.bf16.msra.mxu0 0
    %329 = vmatprep.subr.bf16.mxu0 0
    %330 = vmatpush2.bf16.msra.mxu0 0
    %331 = vmatprep.subr.bf16.mxu0 0
    %332 = vmatpush2.bf16.msra.mxu0 0
    %333 = vmatprep.mubr.bf16.mxu0 0
    %334 = vmatmul.mubr.bf16.gmra.mxu0 %v258
    %v335 = vpop.f32.mrf.mxu0
    %v336 = vadd.f32 %v235, %v335
    %v337 = vpop.f32.mrf.mxu0
    %v338 = vpop.f32.mrf.mxu0
    %v339 = vpop.f32.mrf.mxu0
    %340 = vdwg.mxu0
    %v341 = vld [vmem:[%s6] sm:$0x7]
    %v343 = vlaneseq
    %v344 = vshrl.u32 %v343, 7
    %v345 = vsub.s32 0, %v344
    %v346 = vrot.slane %v341, %v345
    %v347 = vlaneseq
    %v348 = vshrl.u32 %v347, 7
    %v349 = vsub.s32 1, %v348
    %v350 = vrot.slane %v341, %v349
    %v351 = vlaneseq
    %v352 = vshrl.u32 %v351, 7
    %v353 = vsub.s32 2, %v352
    %v354 = vrot.slane %v341, %v353
    %v358 = vadd.f32 %v295, %v346
    %v359 = vadd.f32 %v297, %v350
    %v360 = vadd.f32 %v336, %v354
    %v361 = vld [vmem:[#allocation5] sm:$0xff]
    %v362 = vpack.c.bf16 %v361, %v361
    %v363 = vld [vmem:[#allocation10] sm:$0xff]
    %v364 = vld [vmem:[#allocation10 + $0x8] sm:$0xf]
    %v365 = vld [vmem:[#allocation10 + $0xc] sm:$0xff]
    %v366 = vld [vmem:[#allocation10 + $0x14] sm:$0xf]
    %v367 = vld [vmem:[#allocation10 + $0x18] sm:$0xff]
    %v368 = vld [vmem:[#allocation10 + $0x20] sm:$0xf]
    %v369 = vld [vmem:[#allocation10 + $0x24] sm:$0xff]
    %v370 = vld [vmem:[#allocation10 + $0x2c] sm:$0xf]
    %v379 = vunpack.c.l.b16 %v363
    %v380 = vunpack.c.h.b16 %v363
    %v381 = vunpack.c.l.b16 %v364
    %v382 = vunpack.c.l.b16 %v365
    %v383 = vunpack.c.h.b16 %v365
    %v384 = vunpack.c.l.b16 %v366
    %v385 = vunpack.c.l.b16 %v367
    %v386 = vunpack.c.h.b16 %v367
    %v387 = vunpack.c.l.b16 %v368
    %v388 = vunpack.c.l.b16 %v369
    %v389 = vunpack.c.h.b16 %v369
    %v390 = vunpack.c.l.b16 %v370
    %v391 = vpack.c.b16 %v382, %v379
    %v392 = vpack.c.b16 %v383, %v380
    %v393 = vpack.c.b16 %v384, %v381
    %v394 = vpack.c.b16 %v388, %v385
    %v395 = vpack.c.b16 %v389, %v386
    %v396 = vpack.c.b16 %v390, %v387
    %v404 = vsel %vm155, %v362, 0
    %406 = vmatprep.subr.bf16.mxu0 0
    %407 = vmatpush1.bf16.msra.mxu0 0
    %408 = vmatprep.subr.bf16.mxu0 0
    %409 = vmatpush1.bf16.msra.mxu0 0
    %410 = vmatprep.subr.bf16.mxu0 0
    %411 = vmatpush1.bf16.msra.mxu0 0
    %412 = vmatprep.subr.bf16.mxu0 0
    %413 = vmatpush1.bf16.msra.mxu0 0
    %414 = vmatprep.subr.bf16.mxu0 0
    %415 = vmatpush1.bf16.msra.mxu0 0
    %416 = vmatprep.subr.bf16.mxu0 0
    %417 = vmatpush1.bf16.msra.mxu0 0
    %418 = vmatprep.subr.bf16.mxu0 %v395
    %419 = vmatpush1.bf16.msra.mxu0 %v394
    %420 = vmatprep.subr.bf16.mxu0 %v392
    %421 = vmatpush1.bf16.msra.mxu0 %v391
    %422 = vmatprep.subr.bf16.mxu0 0
    %423 = vmatpush2.bf16.msra.mxu0 0
    %424 = vmatprep.subr.bf16.mxu0 0
    %425 = vmatpush2.bf16.msra.mxu0 0
    %426 = vmatprep.subr.bf16.mxu0 0
    %427 = vmatpush2.bf16.msra.mxu0 0
    %428 = vmatprep.subr.bf16.mxu0 0
    %429 = vmatpush2.bf16.msra.mxu0 0
    %430 = vmatprep.subr.bf16.mxu0 0
    %431 = vmatpush2.bf16.msra.mxu0 0
    %432 = vmatprep.subr.bf16.mxu0 0
    %433 = vmatpush2.bf16.msra.mxu0 0
    %434 = vmatprep.subr.bf16.mxu0 0
    %435 = vmatpush2.bf16.msra.mxu0 0
    %436 = vmatprep.subr.bf16.mxu0 0
    %437 = vmatpush2.bf16.msra.mxu0 0
    %438 = vmatprep.mubr.bf16.mxu0 0
    %439 = vmatmul.mubr.bf16.gmra.mxu0 %v404
    %v440 = vpop.f32.mrf.mxu0
    %v441 = vadd.f32 0.0, %v440
    %v442 = vpop.f32.mrf.mxu0
    %v443 = vadd.f32 0.0, %v442
    %v444 = vpop.f32.mrf.mxu0
    %v445 = vpop.f32.mrf.mxu0
    %446 = vdwg.mxu0
    %447 = vmatprep.subr.bf16.mxu0 0
    %448 = vmatpush1.bf16.msra.mxu0 0
    %449 = vmatprep.subr.bf16.mxu0 0
    %450 = vmatpush1.bf16.msra.mxu0 0
    %451 = vmatprep.subr.bf16.mxu0 0
    %452 = vmatpush1.bf16.msra.mxu0 0
    %453 = vmatprep.subr.bf16.mxu0 0
    %454 = vmatpush1.bf16.msra.mxu0 0
    %455 = vmatprep.subr.bf16.mxu0 0
    %456 = vmatpush1.bf16.msra.mxu0 0
    %457 = vmatprep.subr.bf16.mxu0 0
    %458 = vmatpush1.bf16.msra.mxu0 0
    %459 = vmatprep.subr.bf16.mxu0 0
    %460 = vmatpush1.bf16.msra.mxu0 %v396
    %461 = vmatprep.subr.bf16.mxu0 0
    %462 = vmatpush1.bf16.msra.mxu0 %v393
    %463 = vmatprep.subr.bf16.mxu0 0
    %464 = vmatpush2.bf16.msra.mxu0 0
    %465 = vmatprep.subr.bf16.mxu0 0
    %466 = vmatpush2.bf16.msra.mxu0 0
    %467 = vmatprep.subr.bf16.mxu0 0
    %468 = vmatpush2.bf16.msra.mxu0 0
    %469 = vmatprep.subr.bf16.mxu0 0
    %470 = vmatpush2.bf16.msra.mxu0 0
    %471 = vmatprep.subr.bf16.mxu0 0
    %472 = vmatpush2.bf16.msra.mxu0 0
    %473 = vmatprep.subr.bf16.mxu0 0
    %474 = vmatpush2.bf16.msra.mxu0 0
    %475 = vmatprep.subr.bf16.mxu0 0
    %476 = vmatpush2.bf16.msra.mxu0 0
    %477 = vmatprep.subr.bf16.mxu0 0
    %478 = vmatpush2.bf16.msra.mxu0 0
    %479 = vmatprep.mubr.bf16.mxu0 0
    %480 = vmatmul.mubr.bf16.gmra.mxu0 %v404
    %v481 = vpop.f32.mrf.mxu0
    %v482 = vadd.f32 0.0, %v481
    %v483 = vpop.f32.mrf.mxu0
    %v484 = vpop.f32.mrf.mxu0
    %v485 = vpop.f32.mrf.mxu0
    %486 = vdwg.mxu0
    %v487 = vadd.f32 %v441, %v358
    %v488 = vxor.u32 %v487, 2147483648
    %v489 = vmul.f32 %v488, 1.442695
    %v490 = vpow.pop %v489
    %v491 = vadd.f32 %v490, 1.0
    %v492 = vrcp.pop %v491
    %v493 = vmul.f32 1.0, %v492
    %v494 = vadd.f32 %v443, %v359
    %v495 = vxor.u32 %v494, 2147483648
    %v496 = vmul.f32 %v495, 1.442695
    %v497 = vpow.pop %v496
    %v498 = vadd.f32 %v497, 1.0
    %v499 = vrcp.pop %v498
    %v500 = vmul.f32 1.0, %v499
    %v501 = vld [vmem:[%s7] sm:$0x1]
    %v503 = vlaneseq
    %v504 = vshrl.u32 %v503, 7
    %v505 = vsub.s32 0, %v504
    %v506 = vrot.slane %v501, %v505
    %v508 = vadd.f32 %v482, %v506
    %v509 = vmul.f32 %v493, %v508
    %v510 = vadd.f32 %v360, %v509
    %v511 = vtanh.pop %v510
    %v512 = vsub.f32 %v361, %v511
    %v513 = vmul.f32 %v500, %v512
    %v514 = vadd.f32 %v511, %v513
    %515 = vst.msk [vmem:[#allocation13] sm:$0xff] %vm155, %v514
    // Predicated region
    $region58: #{tpu_custom_call.1} parent=1 // pred_check
      _
    $region59: #{tpu_custom_call.1} parent=1 // pred_check_branch
      %517 = sbr.rel (0) target = $region61
    $region60: #{tpu_custom_call.1} parent=1 // pred_region
      %s519 = ssub.s32 128, 128
      %520 = vsyncadd [#allocation4], %s519
      %s522 = sshll.u32 [#allocation13], 4
      %s523 = int_to_ptr.vmem [resolvable:$true] %s522
      %525 = dma.vmem_to_hbm [thread:$0]  %s523, 128, %s8, [#allocation4]
    $region61: #{tpu_custom_call.1} parent=1 // pred_fallthru
      _
    // Predicated region
    $region62: #{tpu_custom_call.1} parent=1 // pred_check
      _
    $region63: #{tpu_custom_call.1} parent=1 // pred_check_branch
      %527 = sbr.rel (0) target = $region65
    $region64: #{tpu_custom_call.1} parent=1 // pred_region
      %528 = dma.done [#allocation4], 128
    $region65: #{tpu_custom_call.1} parent=1 // pred_fallthru
      _
    %529 = vsyncpa [#allocation3], 1
    %530 = vsyncpa [#allocation6], 1
    %531 = vsyncpa [#allocation9], 1
    %532 = vsyncpa [#allocation12], 1
    %533 = vsyncpa [#allocation4], 1

// kernel: tpu_custom_call.1
$region0: #{tpu_custom_call.1}
  #allocation0 [shape = 'u32[]', space=smem, size = 0x4, offset = 0x4, fixed_abs, tag = 'smem constant byte address 0x4 - core index']
  #allocation1 [shape = 'u32[144,128]{1,0:T(1,128)}', space=vmem, size = 0x12000, scoped, tag = 'internal scratch']
  %s0 = inlined_call_operand.hbm [shape: f32[8,16], index: 0, kind: input, shape index: {}]
  %s1 = inlined_call_operand.hbm [shape: f32[8,32], index: 1, kind: input, shape index: {}]
  %s2 = inlined_call_operand.hbm [shape: f32[8,32], index: 2, kind: input, shape index: {}]
  %s3 = inlined_call_operand.hbm [shape: bf16[16,384], index: 3, kind: input, shape index: {}]
  %s4 = inlined_call_operand.hbm [shape: bf16[32,384], index: 4, kind: input, shape index: {}]
  %s5 = inlined_call_operand.hbm [shape: bf16[32,384], index: 5, kind: input, shape index: {}]
  %s6 = inlined_call_operand.vmem [shape: f32[1,384], index: 6, kind: input, shape index: {}]
  %s7 = inlined_call_operand.vmem [shape: f32[1,128], index: 7, kind: input, shape index: {}]
  %s8 = inlined_call_operand.hbm [shape: f32[8,32], index: 8, kind: output, shape index: {}]
  %s9 = sld [smem:[#allocation0]]
  $region66: #{tpu_custom_call.1} parent=0
    _
  %s11 = ssub.s32 1, %s9
  %s12 = scalar_select 0, %s11, %s9
  $region1: #{tpu_custom_call.1} parent=0
    #allocation2 [shape = 'u8[4096]{0}', space=vmem, size = 0x1000, scoped, tag = 'input window, operand 0, single buffered']
    #allocation3 [shape = 's32[1]{0}', space=sflag, size = 0x4, scoped, tag = 'scoped memory for tpu_custom_call.1']
    #allocation4 [shape = 's32[1]{0}', space=sflag, size = 0x4, scoped, tag = 'scoped memory for tpu_custom_call.1']
    #allocation5 [shape = 'u8[4096]{0}', space=vmem, size = 0x1000, scoped, tag = 'input window, operand 1, single buffered']
    #allocation6 [shape = 's32[1]{0}', space=sflag, size = 0x4, scoped, tag = 'scoped memory for tpu_custom_call.1']
    #allocation7 [shape = 'u8[4096]{0}', space=vmem, size = 0x1000, scoped, tag = 'input window, operand 2, single buffered']
    #allocation8 [shape = 'u8[12288]{0}', space=vmem, size = 0x3000, scoped, tag = 'input window, operand 3, single buffered']
    #allocation9 [shape = 's32[1]{0}', space=sflag, size = 0x4, scoped, tag = 'scoped memory for tpu_custom_call.1']
    #allocation10 [shape = 'u8[24576]{0}', space=vmem, size = 0x6000, scoped, tag = 'input window, operand 4, single buffered']
    #allocation11 [shape = 'u8[24576]{0}', space=vmem, size = 0x6000, scoped, tag = 'input window, operand 5, single buffered']
    #allocation12 [shape = 's32[1]{0}', space=sflag, size = 0x4, scoped, tag = 'scoped memory for tpu_custom_call.1']
    #allocation13 [shape = 'u8[4096]{0}', space=vmem, size = 0x1000, scoped, tag = 'output window, operand 0, single buffered']
    %13 = vsyncpa [#allocation3], 0
    %14 = vsyncpa [#allocation6], 0
    %15 = vsyncpa [#allocation9], 0
    %16 = vsyncpa [#allocation12], 0
    %17 = vsyncpa [#allocation4], 0
    // Predicated region
    $region2: #{tpu_custom_call.1} parent=1 // pred_check
      _
    $region3: #{tpu_custom_call.1} parent=1 // pred_check_branch
      %19 = sbr.rel (0) target = $region5
    $region4: #{tpu_custom_call.1} parent=1 // pred_region
      %s21 = ssub.s32 128, 128
      %22 = vsyncadd [#allocation3], %s21
      %s24 = sshll.u32 [#allocation2], 4
      %s25 = int_to_ptr.vmem [resolvable:$true] %s24
      %27 = dma.hbm_to_vmem [thread:$0]  %s0, 128, %s25, [#allocation3]
    $region5: #{tpu_custom_call.1} parent=1 // pred_fallthru
      _
    // Predicated region
    $region6: #{tpu_custom_call.1} parent=1 // pred_check
      _
    $region7: #{tpu_custom_call.1} parent=1 // pred_check_branch
      %29 = sbr.rel (0) target = $region9
    $region8: #{tpu_custom_call.1} parent=1 // pred_region
      %s31 = ssub.s32 128, 128
      %32 = vsyncadd [#allocation6], %s31
      %s34 = sshll.u32 [#allocation5], 4
      %s35 = int_to_ptr.vmem [resolvable:$true] %s34
      %37 = dma.hbm_to_vmem [thread:$0]  %s1, 128, %s35, [#allocation6]
    $region9: #{tpu_custom_call.1} parent=1 // pred_fallthru
      _
    // Predicated region
    $region10: #{tpu_custom_call.1} parent=1 // pred_check
      _
    $region11: #{tpu_custom_call.1} parent=1 // pred_check_branch
      %39 = sbr.rel (0) target = $region13
    $region12: #{tpu_custom_call.1} parent=1 // pred_region
      %s41 = ssub.s32 128, 128
      %42 = vsyncadd [#allocation6], %s41
      %s44 = sshll.u32 [#allocation7], 4
      %s45 = int_to_ptr.vmem [resolvable:$true] %s44
      %47 = dma.hbm_to_vmem [thread:$0]  %s2, 128, %s45, [#allocation6]
    $region13: #{tpu_custom_call.1} parent=1 // pred_fallthru
      _
    // Predicated region
    $region14: #{tpu_custom_call.1} parent=1 // pred_check
      _
    $region15: #{tpu_custom_call.1} parent=1 // pred_check_branch
      %49 = sbr.rel (0) target = $region17
    $region16: #{tpu_custom_call.1} parent=1 // pred_region
      %s51 = ssub.s32 384, 384
      %52 = vsyncadd [#allocation9], %s51
      %s53 = sshll.u32 [#allocation8], 4
      %s54 = int_to_ptr.vmem [resolvable:$true] %s53
      %59 = dma.hbm_to_vmem [thread:$0]  %s3, 384, %s54, [#allocation9], 192, 192, 12
    $region17: #{tpu_custom_call.1} parent=1 // pred_fallthru
      _
    // Predicated region
    $region18: #{tpu_custom_call.1} parent=1 // pred_check
      _
    $region19: #{tpu_custom_call.1} parent=1 // pred_check_branch
      %61 = sbr.rel (0) target = $region21
    $region20: #{tpu_custom_call.1} parent=1 // pred_region
      %s63 = ssub.s32 768, 768
      %64 = vsyncadd [#allocation9], %s63
      %s65 = sshll.u32 [#allocation10], 4
      %s66 = int_to_ptr.vmem [resolvable:$true] %s65
      %71 = dma.hbm_to_vmem [thread:$0]  %s4, 768, %s66, [#allocation9], 192, 192, 12
    $region21: #{tpu_custom_call.1} parent=1 // pred_fallthru
      _
    // Predicated region
    $region22: #{tpu_custom_call.1} parent=1 // pred_check
      _
    $region23: #{tpu_custom_call.1} parent=1 // pred_check_branch
      %73 = sbr.rel (0) target = $region25
    $region24: #{tpu_custom_call.1} parent=1 // pred_region
      %s75 = ssub.s32 768, 768
      %76 = vsyncadd [#allocation12], %s75
      %s77 = sshll.u32 [#allocation11], 4
      %s78 = int_to_ptr.vmem [resolvable:$true] %s77
      %83 = dma.hbm_to_vmem [thread:$0]  %s5, 768, %s78, [#allocation12], 192, 192, 12
    $region25: #{tpu_custom_call.1} parent=1 // pred_fallthru
      _
    // Predicated region
    $region26: #{tpu_custom_call.1} parent=1 // pred_check
      _
    $region27: #{tpu_custom_call.1} parent=1 // pred_check_branch
      %85 = sbr.rel (0) target = $region29
    $region28: #{tpu_custom_call.1} parent=1 // pred_region
      _
    $region29: #{tpu_custom_call.1} parent=1 // pred_fallthru
      _
    // Predicated region
    $region30: #{tpu_custom_call.1} parent=1 // pred_check
      _
    $region31: #{tpu_custom_call.1} parent=1 // pred_check_branch
      %87 = sbr.rel (0) target = $region33
    $region32: #{tpu_custom_call.1} parent=1 // pred_region
      _
    $region33: #{tpu_custom_call.1} parent=1 // pred_fallthru
      _
    // Predicated region
    $region34: #{tpu_custom_call.1} parent=1 // pred_check
      _
    $region35: #{tpu_custom_call.1} parent=1 // pred_check_branch
      %89 = sbr.rel (0) target = $region37
    $region36: #{tpu_custom_call.1} parent=1 // pred_region
      %90 = dma.done [#allocation3], 128
    $region37: #{tpu_custom_call.1} parent=1 // pred_fallthru
      _
    // Predicated region
    $region38: #{tpu_custom_call.1} parent=1 // pred_check
      _
    $region39: #{tpu_custom_call.1} parent=1 // pred_check_branch
      %92 = sbr.rel (0) target = $region41
    $region40: #{tpu_custom_call.1} parent=1 // pred_region
      %93 = dma.done [#allocation6], 128
    $region41: #{tpu_custom_call.1} parent=1 // pred_fallthru
      _
    // Predicated region
    $region42: #{tpu_custom_call.1} parent=1 // pred_check
      _
    $region43: #{tpu_custom_call.1} parent=1 // pred_check_branch
      %95 = sbr.rel (0) target = $region45
    $region44: #{tpu_custom_call.1} parent=1 // pred_region
      %96 = dma.done [#allocation6], 128
    $region45: #{tpu_custom_call.1} parent=1 // pred_fallthru
      _
    // Predicated region
    $region46: #{tpu_custom_call.1} parent=1 // pred_check
      _
    $region47: #{tpu_custom_call.1} parent=1 // pred_check_branch
      %98 = sbr.rel (0) target = $region49
    $region48: #{tpu_custom_call.1} parent=1 // pred_region
      %99 = dma.done [#allocation9], 384
    $region49: #{tpu_custom_call.1} parent=1 // pred_fallthru
      _
    // Predicated region
    $region50: #{tpu_custom_call.1} parent=1 // pred_check
      _
    $region51: #{tpu_custom_call.1} parent=1 // pred_check_branch
      %101 = sbr.rel (0) target = $region53
    $region52: #{tpu_custom_call.1} parent=1 // pred_region
      %102 = dma.done [#allocation9], 768
    $region53: #{tpu_custom_call.1} parent=1 // pred_fallthru
      _
    // Predicated region
    $region54: #{tpu_custom_call.1} parent=1 // pred_check
      _
    $region55: #{tpu_custom_call.1} parent=1 // pred_check_branch
      %104 = sbr.rel (0) target = $region57
    $region56: #{tpu_custom_call.1} parent=1 // pred_region
      %105 = dma.done [#allocation12], 768
    $region57: #{tpu_custom_call.1} parent=1 // pred_fallthru
      _
    %v107 = vld [vmem:[#allocation2] sm:$0xff]
    %v108 = vpack.c.bf16 %v107, %v107
    %v109 = vld [vmem:[#allocation8] sm:$0xff]
    %v110 = vld [vmem:[#allocation8 + $0x8] sm:$0xf]
    %v111 = vld [vmem:[#allocation8 + $0xc] sm:$0xff]
    %v112 = vld [vmem:[#allocation8 + $0x14] sm:$0xf]
    %v113 = vld [vmem:[#allocation7] sm:$0xff]
    %v114 = vpack.c.bf16 %v113, %v113
    %v115 = vld [vmem:[#allocation11] sm:$0xff]
    %v116 = vld [vmem:[#allocation11 + $0x8] sm:$0xf]
    %v117 = vld [vmem:[#allocation11 + $0xc] sm:$0xff]
    %v118 = vld [vmem:[#allocation11 + $0x14] sm:$0xf]
    %v119 = vld [vmem:[#allocation11 + $0x18] sm:$0xff]
    %v120 = vld [vmem:[#allocation11 + $0x20] sm:$0xf]
    %v121 = vld [vmem:[#allocation11 + $0x24] sm:$0xff]
    %v122 = vld [vmem:[#allocation11 + $0x2c] sm:$0xf]
    %v131 = vunpack.c.l.b16 %v115
    %v132 = vunpack.c.h.b16 %v115
    %v133 = vunpack.c.l.b16 %v116
    %v134 = vunpack.c.l.b16 %v117
    %v135 = vunpack.c.h.b16 %v117
    %v136 = vunpack.c.l.b16 %v118
    %v137 = vunpack.c.l.b16 %v119
    %v138 = vunpack.c.h.b16 %v119
    %v139 = vunpack.c.l.b16 %v120
    %v140 = vunpack.c.l.b16 %v121
    %v141 = vunpack.c.h.b16 %v121
    %v142 = vunpack.c.l.b16 %v122
    %v143 = vpack.c.b16 %v134, %v131
    %v144 = vpack.c.b16 %v135, %v132
    %v145 = vpack.c.b16 %v136, %v133
    %v146 = vpack.c.b16 %v140, %v137
    %v147 = vpack.c.b16 %v141, %v138
    %v148 = vpack.c.b16 %v142, %v139
    %vm155 = vcmask 261120
    %v157 = vsel %vm155, %v114, 0
    %159 = vmatprep.subr.bf16.mxu0 0
    %160 = vmatpush1.bf16.msra.mxu0 0
    %161 = vmatprep.subr.bf16.mxu0 0
    %162 = vmatpush1.bf16.msra.mxu0 0
    %163 = vmatprep.subr.bf16.mxu0 0
    %164 = vmatpush1.bf16.msra.mxu0 0
    %165 = vmatprep.subr.bf16.mxu0 0
    %166 = vmatpush1.bf16.msra.mxu0 0
    %167 = vmatprep.subr.bf16.mxu0 0
    %168 = vmatpush1.bf16.msra.mxu0 0
    %169 = vmatprep.subr.bf16.mxu0 0
    %170 = vmatpush1.bf16.msra.mxu0 0
    %171 = vmatprep.subr.bf16.mxu0 %v147
    %172 = vmatpush1.bf16.msra.mxu0 %v146
    %173 = vmatprep.subr.bf16.mxu0 %v144
    %174 = vmatpush1.bf16.msra.mxu0 %v143
    %175 = vmatprep.subr.bf16.mxu0 0
    %176 = vmatpush2.bf16.msra.mxu0 0
    %177 = vmatprep.subr.bf16.mxu0 0
    %178 = vmatpush2.bf16.msra.mxu0 0
    %179 = vmatprep.subr.bf16.mxu0 0
    %180 = vmatpush2.bf16.msra.mxu0 0
    %181 = vmatprep.subr.bf16.mxu0 0
    %182 = vmatpush2.bf16.msra.mxu0 0
    %183 = vmatprep.subr.bf16.mxu0 0
    %184 = vmatpush2.bf16.msra.mxu0 0
    %185 = vmatprep.subr.bf16.mxu0 0
    %186 = vmatpush2.bf16.msra.mxu0 0
    %187 = vmatprep.subr.bf16.mxu0 0
    %188 = vmatpush2.bf16.msra.mxu0 0
    %189 = vmatprep.subr.bf16.mxu0 0
    %190 = vmatpush2.bf16.msra.mxu0 0
    %191 = vmatprep.mubr.bf16.mxu0 0
    %192 = vmatmul.mubr.bf16.gmra.mxu0 %v157
    %v193 = vpop.f32.mrf.mxu0
    %v194 = vadd.f32 0.0, %v193
    %v195 = vpop.f32.mrf.mxu0
    %v196 = vadd.f32 0.0, %v195
    %v197 = vpop.f32.mrf.mxu0
    %v198 = vpop.f32.mrf.mxu0
    %199 = vdwg.mxu0
    %200 = vmatprep.subr.bf16.mxu0 0
    %201 = vmatpush1.bf16.msra.mxu0 0
    %202 = vmatprep.subr.bf16.mxu0 0
    %203 = vmatpush1.bf16.msra.mxu0 0
    %204 = vmatprep.subr.bf16.mxu0 0
    %205 = vmatpush1.bf16.msra.mxu0 0
    %206 = vmatprep.subr.bf16.mxu0 0
    %207 = vmatpush1.bf16.msra.mxu0 0
    %208 = vmatprep.subr.bf16.mxu0 0
    %209 = vmatpush1.bf16.msra.mxu0 0
    %210 = vmatprep.subr.bf16.mxu0 0
    %211 = vmatpush1.bf16.msra.mxu0 0
    %212 = vmatprep.subr.bf16.mxu0 0
    %213 = vmatpush1.bf16.msra.mxu0 %v148
    %214 = vmatprep.subr.bf16.mxu0 0
    %215 = vmatpush1.bf16.msra.mxu0 %v145
    %216 = vmatprep.subr.bf16.mxu0 0
    %217 = vmatpush2.bf16.msra.mxu0 0
    %218 = vmatprep.subr.bf16.mxu0 0
    %219 = vmatpush2.bf16.msra.mxu0 0
    %220 = vmatprep.subr.bf16.mxu0 0
    %221 = vmatpush2.bf16.msra.mxu0 0
    %222 = vmatprep.subr.bf16.mxu0 0
    %223 = vmatpush2.bf16.msra.mxu0 0
    %224 = vmatprep.subr.bf16.mxu0 0
    %225 = vmatpush2.bf16.msra.mxu0 0
    %226 = vmatprep.subr.bf16.mxu0 0
    %227 = vmatpush2.bf16.msra.mxu0 0
    %228 = vmatprep.subr.bf16.mxu0 0
    %229 = vmatpush2.bf16.msra.mxu0 0
    %230 = vmatprep.subr.bf16.mxu0 0
    %231 = vmatpush2.bf16.msra.mxu0 0
    %232 = vmatprep.mubr.bf16.mxu0 0
    %233 = vmatmul.mubr.bf16.gmra.mxu0 %v157
    %v234 = vpop.f32.mrf.mxu0
    %v235 = vadd.f32 0.0, %v234
    %v236 = vpop.f32.mrf.mxu0
    %v237 = vpop.f32.mrf.mxu0
    %v238 = vpop.f32.mrf.mxu0
    %239 = vdwg.mxu0
    %v244 = vunpack.c.l.b16 %v109
    %v245 = vunpack.c.h.b16 %v109
    %v246 = vunpack.c.l.b16 %v110
    %v247 = vunpack.c.l.b16 %v111
    %v248 = vunpack.c.h.b16 %v111
    %v249 = vunpack.c.l.b16 %v112
    %v250 = vpack.c.b16 %v247, %v244
    %v251 = vpack.c.b16 %v248, %v245
    %v252 = vpack.c.b16 %v249, %v246
    %vm256 = vcmask 130048
    %v258 = vsel %vm256, %v108, 0
    %260 = vmatprep.subr.bf16.mxu0 0
    %261 = vmatpush1.bf16.msra.mxu0 0
    %262 = vmatprep.subr.bf16.mxu0 0
    %263 = vmatpush1.bf16.msra.mxu0 0
    %264 = vmatprep.subr.bf16.mxu0 0
    %265 = vmatpush1.bf16.msra.mxu0 0
    %266 = vmatprep.subr.bf16.mxu0 0
    %267 = vmatpush1.bf16.msra.mxu0 0
    %268 = vmatprep.subr.bf16.mxu0 0
    %269 = vmatpush1.bf16.msra.mxu0 0
    %270 = vmatprep.subr.bf16.mxu0 0
    %271 = vmatpush1.bf16.msra.mxu0 0
    %272 = vmatprep.subr.bf16.mxu0 0
    %273 = vmatpush1.bf16.msra.mxu0 0
    %274 = vmatprep.subr.bf16.mxu0 %v251
    %275 = vmatpush1.bf16.msra.mxu0 %v250
    %276 = vmatprep.subr.bf16.mxu0 0
    %277 = vmatpush2.bf16.msra.mxu0 0
    %278 = vmatprep.subr.bf16.mxu0 0
    %279 = vmatpush2.bf16.msra.mxu0 0
    %280 = vmatprep.subr.bf16.mxu0 0
    %281 = vmatpush2.bf16.msra.mxu0 0
    %282 = vmatprep.subr.bf16.mxu0 0
    %283 = vmatpush2.bf16.msra.mxu0 0
    %284 = vmatprep.subr.bf16.mxu0 0
    %285 = vmatpush2.bf16.msra.mxu0 0
    %286 = vmatprep.subr.bf16.mxu0 0
    %287 = vmatpush2.bf16.msra.mxu0 0
    %288 = vmatprep.subr.bf16.mxu0 0
    %289 = vmatpush2.bf16.msra.mxu0 0
    %290 = vmatprep.subr.bf16.mxu0 0
    %291 = vmatpush2.bf16.msra.mxu0 0
    %292 = vmatprep.mubr.bf16.mxu0 0
    %293 = vmatmul.mubr.bf16.gmra.mxu0 %v258
    %v294 = vpop.f32.mrf.mxu0
    %v295 = vadd.f32 %v194, %v294
    %v296 = vpop.f32.mrf.mxu0
    %v297 = vadd.f32 %v196, %v296
    %v298 = vpop.f32.mrf.mxu0
    %v299 = vpop.f32.mrf.mxu0
    %300 = vdwg.mxu0
    %301 = vmatprep.subr.bf16.mxu0 0
    %302 = vmatpush1.bf16.msra.mxu0 0
    %303 = vmatprep.subr.bf16.mxu0 0
    %304 = vmatpush1.bf16.msra.mxu0 0
    %305 = vmatprep.subr.bf16.mxu0 0
    %306 = vmatpush1.bf16.msra.mxu0 0
    %307 = vmatprep.subr.bf16.mxu0 0
    %308 = vmatpush1.bf16.msra.mxu0 0
    %309 = vmatprep.subr.bf16.mxu0 0
    %310 = vmatpush1.bf16.msra.mxu0 0
    %311 = vmatprep.subr.bf16.mxu0 0
    %312 = vmatpush1.bf16.msra.mxu0 0
    %313 = vmatprep.subr.bf16.mxu0 0
    %314 = vmatpush1.bf16.msra.mxu0 0
    %315 = vmatprep.subr.bf16.mxu0 0
    %316 = vmatpush1.bf16.msra.mxu0 %v252
    %317 = vmatprep.subr.bf16.mxu0 0
    %318 = vmatpush2.bf16.msra.mxu0 0
    %319 = vmatprep.subr.bf16.mxu0 0
    %320 = vmatpush2.bf16.msra.mxu0 0
    %321 = vmatprep.subr.bf16.mxu0 0
    %322 = vmatpush2.bf16.msra.mxu0 0
    %323 = vmatprep.subr.bf16.mxu0 0
    %324 = vmatpush2.bf16.msra.mxu0 0
    %325 = vmatprep.subr.bf16.mxu0 0
    %326 = vmatpush2.bf16.msra.mxu0 0
    %327 = vmatprep.subr.bf16.mxu0 0
    %328 = vmatpush2.bf16.msra.mxu0 0
    %329 = vmatprep.subr.bf16.mxu0 0
    %330 = vmatpush2.bf16.msra.mxu0 0
    %331 = vmatprep.subr.bf16.mxu0 0
    %332 = vmatpush2.bf16.msra.mxu0 0
    %333 = vmatprep.mubr.bf16.mxu0 0
    %334 = vmatmul.mubr.bf16.gmra.mxu0 %v258
    %v335 = vpop.f32.mrf.mxu0
    %v336 = vadd.f32 %v235, %v335
    %v337 = vpop.f32.mrf.mxu0
    %v338 = vpop.f32.mrf.mxu0
    %v339 = vpop.f32.mrf.mxu0
    %340 = vdwg.mxu0
    %v341 = vld [vmem:[%s6] sm:$0x7]
    %v343 = vlaneseq
    %v344 = vshrl.u32 %v343, 7
    %v345 = vsub.s32 0, %v344
    %v346 = vrot.slane %v341, %v345
    %v347 = vlaneseq
    %v348 = vshrl.u32 %v347, 7
    %v349 = vsub.s32 1, %v348
    %v350 = vrot.slane %v341, %v349
    %v351 = vlaneseq
    %v352 = vshrl.u32 %v351, 7
    %v353 = vsub.s32 2, %v352
    %v354 = vrot.slane %v341, %v353
    %v358 = vadd.f32 %v295, %v346
    %v359 = vadd.f32 %v297, %v350
    %v360 = vadd.f32 %v336, %v354
    %v361 = vld [vmem:[#allocation5] sm:$0xff]
    %v362 = vpack.c.bf16 %v361, %v361
    %v363 = vld [vmem:[#allocation10] sm:$0xff]
    %v364 = vld [vmem:[#allocation10 + $0x8] sm:$0xf]
    %v365 = vld [vmem:[#allocation10 + $0xc] sm:$0xff]
    %v366 = vld [vmem:[#allocation10 + $0x14] sm:$0xf]
    %v367 = vld [vmem:[#allocation10 + $0x18] sm:$0xff]
    %v368 = vld [vmem:[#allocation10 + $0x20] sm:$0xf]
    %v369 = vld [vmem:[#allocation10 + $0x24] sm:$0xff]
    %v370 = vld [vmem:[#allocation10 + $0x2c] sm:$0xf]
    %v379 = vunpack.c.l.b16 %v363
    %v380 = vunpack.c.h.b16 %v363
    %v381 = vunpack.c.l.b16 %v364
    %v382 = vunpack.c.l.b16 %v365
    %v383 = vunpack.c.h.b16 %v365
    %v384 = vunpack.c.l.b16 %v366
    %v385 = vunpack.c.l.b16 %v367
    %v386 = vunpack.c.h.b16 %v367
    %v387 = vunpack.c.l.b16 %v368
    %v388 = vunpack.c.l.b16 %v369
    %v389 = vunpack.c.h.b16 %v369
    %v390 = vunpack.c.l.b16 %v370
    %v391 = vpack.c.b16 %v382, %v379
    %v392 = vpack.c.b16 %v383, %v380
    %v393 = vpack.c.b16 %v384, %v381
    %v394 = vpack.c.b16 %v388, %v385
    %v395 = vpack.c.b16 %v389, %v386
    %v396 = vpack.c.b16 %v390, %v387
    %v404 = vsel %vm155, %v362, 0
    %406 = vmatprep.subr.bf16.mxu0 0
    %407 = vmatpush1.bf16.msra.mxu0 0
    %408 = vmatprep.subr.bf16.mxu0 0
    %409 = vmatpush1.bf16.msra.mxu0 0
    %410 = vmatprep.subr.bf16.mxu0 0
    %411 = vmatpush1.bf16.msra.mxu0 0
    %412 = vmatprep.subr.bf16.mxu0 0
    %413 = vmatpush1.bf16.msra.mxu0 0
    %414 = vmatprep.subr.bf16.mxu0 0
    %415 = vmatpush1.bf16.msra.mxu0 0
    %416 = vmatprep.subr.bf16.mxu0 0
    %417 = vmatpush1.bf16.msra.mxu0 0
    %418 = vmatprep.subr.bf16.mxu0 %v395
    %419 = vmatpush1.bf16.msra.mxu0 %v394
    %420 = vmatprep.subr.bf16.mxu0 %v392
    %421 = vmatpush1.bf16.msra.mxu0 %v391
    %422 = vmatprep.subr.bf16.mxu0 0
    %423 = vmatpush2.bf16.msra.mxu0 0
    %424 = vmatprep.subr.bf16.mxu0 0
    %425 = vmatpush2.bf16.msra.mxu0 0
    %426 = vmatprep.subr.bf16.mxu0 0
    %427 = vmatpush2.bf16.msra.mxu0 0
    %428 = vmatprep.subr.bf16.mxu0 0
    %429 = vmatpush2.bf16.msra.mxu0 0
    %430 = vmatprep.subr.bf16.mxu0 0
    %431 = vmatpush2.bf16.msra.mxu0 0
    %432 = vmatprep.subr.bf16.mxu0 0
    %433 = vmatpush2.bf16.msra.mxu0 0
    %434 = vmatprep.subr.bf16.mxu0 0
    %435 = vmatpush2.bf16.msra.mxu0 0
    %436 = vmatprep.subr.bf16.mxu0 0
    %437 = vmatpush2.bf16.msra.mxu0 0
    %438 = vmatprep.mubr.bf16.mxu0 0
    %439 = vmatmul.mubr.bf16.gmra.mxu0 %v404
    %v440 = vpop.f32.mrf.mxu0
    %v441 = vadd.f32 0.0, %v440
    %v442 = vpop.f32.mrf.mxu0
    %v443 = vadd.f32 0.0, %v442
    %v444 = vpop.f32.mrf.mxu0
    %v445 = vpop.f32.mrf.mxu0
    %446 = vdwg.mxu0
    %447 = vmatprep.subr.bf16.mxu0 0
    %448 = vmatpush1.bf16.msra.mxu0 0
    %449 = vmatprep.subr.bf16.mxu0 0
    %450 = vmatpush1.bf16.msra.mxu0 0
    %451 = vmatprep.subr.bf16.mxu0 0
    %452 = vmatpush1.bf16.msra.mxu0 0
    %453 = vmatprep.subr.bf16.mxu0 0
    %454 = vmatpush1.bf16.msra.mxu0 0
    %455 = vmatprep.subr.bf16.mxu0 0
    %456 = vmatpush1.bf16.msra.mxu0 0
    %457 = vmatprep.subr.bf16.mxu0 0
    %458 = vmatpush1.bf16.msra.mxu0 0
    %459 = vmatprep.subr.bf16.mxu0 0
    %460 = vmatpush1.bf16.msra.mxu0 %v396
    %461 = vmatprep.subr.bf16.mxu0 0
    %462 = vmatpush1.bf16.msra.mxu0 %v393
    %463 = vmatprep.subr.bf16.mxu0 0
    %464 = vmatpush2.bf16.msra.mxu0 0
    %465 = vmatprep.subr.bf16.mxu0 0
    %466 = vmatpush2.bf16.msra.mxu0 0
    %467 = vmatprep.subr.bf16.mxu0 0
    %468 = vmatpush2.bf16.msra.mxu0 0
    %469 = vmatprep.subr.bf16.mxu0 0
    %470 = vmatpush2.bf16.msra.mxu0 0
    %471 = vmatprep.subr.bf16.mxu0 0
    %472 = vmatpush2.bf16.msra.mxu0 0
    %473 = vmatprep.subr.bf16.mxu0 0
    %474 = vmatpush2.bf16.msra.mxu0 0
    %475 = vmatprep.subr.bf16.mxu0 0
    %476 = vmatpush2.bf16.msra.mxu0 0
    %477 = vmatprep.subr.bf16.mxu0 0
    %478 = vmatpush2.bf16.msra.mxu0 0
    %479 = vmatprep.mubr.bf16.mxu0 0
    %480 = vmatmul.mubr.bf16.gmra.mxu0 %v404
    %v481 = vpop.f32.mrf.mxu0
    %v482 = vadd.f32 0.0, %v481
    %v483 = vpop.f32.mrf.mxu0
    %v484 = vpop.f32.mrf.mxu0
    %v485 = vpop.f32.mrf.mxu0
    %486 = vdwg.mxu0
    %v487 = vadd.f32 %v441, %v358
    %v488 = vxor.u32 %v487, 2147483648
    %v489 = vmul.f32 %v488, 1.442695
    %v490 = vpow.pop %v489
    %v491 = vadd.f32 %v490, 1.0
    %v492 = vrcp.pop %v491
    %v493 = vmul.f32 1.0, %v492
    %v494 = vadd.f32 %v443, %v359
    %v495 = vxor.u32 %v494, 2147483648
    %v496 = vmul.f32 %v495, 1.442695
    %v497 = vpow.pop %v496
    %v498 = vadd.f32 %v497, 1.0
    %v499 = vrcp.pop %v498
    %v500 = vmul.f32 1.0, %v499
    %v501 = vld [vmem:[%s7] sm:$0x1]
    %v503 = vlaneseq
    %v504 = vshrl.u32 %v503, 7
    %v505 = vsub.s32 0, %v504
    %v506 = vrot.slane %v501, %v505
    %v508 = vadd.f32 %v482, %v506
    %v509 = vmul.f32 %v493, %v508
    %v510 = vadd.f32 %v360, %v509
    %v511 = vtanh.pop %v510
    %v512 = vsub.f32 %v361, %v511
    %v513 = vmul.f32 %v500, %v512
    %v514 = vadd.f32 %v511, %v513
    %515 = vst.msk [vmem:[#allocation13] sm:$0xff] %vm155, %v514
    // Predicated region
    $region58: #{tpu_custom_call.1} parent=1 // pred_check
      _
    $region59: #{tpu_custom_call.1} parent=1 // pred_check_branch
      %517 = sbr.rel (0) target = $region61
    $region60: #{tpu_custom_call.1} parent=1 // pred_region
      %s519 = ssub.s32 128, 128
      %520 = vsyncadd [#allocation4], %s519
      %s522 = sshll.u32 [#allocation13], 4
      %s523 = int_to_ptr.vmem [resolvable:$true] %s522
      %525 = dma.vmem_to_hbm [thread:$0]  %s523, 128, %s8, [#allocation4]
    $region61: #{tpu_custom_call.1} parent=1 // pred_fallthru
      _
    // Predicated region
    $region62: #{tpu_custom_call.1} parent=1 // pred_check
      _
    $region63: #{tpu_custom_call.1} parent=1 // pred_check_branch
      %527 = sbr.rel (0) target = $region65
    $region64: #{tpu_custom_call.1} parent=1 // pred_region
      %528 = dma.done [#allocation4], 128
    $region65: #{tpu_custom_call.1} parent=1 // pred_fallthru
      _
    %529 = vsyncpa [#allocation3], 1
    %530 = vsyncpa [#allocation6], 1
    %531 = vsyncpa [#allocation9], 1
    %532 = vsyncpa [#allocation12], 1
    %533 = vsyncpa [#allocation4], 1

</llo_original>
